<compile_context>
chip_gen: v6e
topology: v6e:2x2x1
jax: 0.10.0
libtpu: 0.0.40
codegen_flags: <defaults>
</compile_context>

<pallas_src>
import functools

import jax
import jax.numpy as jnp
from jax import lax
from jax.experimental import pallas as pl
from jax.experimental.pallas import tpu as pltpu

LN_EPS = 1e-5  # nn.LayerNorm default
_MiB = 1024 * 1024


def _round_up(x, m):
    return ((x + m - 1) // m) * m


def _vmem_capacity_bytes():
    try:
        info = pltpu.get_tpu_info()
        cap = getattr(info, "vmem_capacity_bytes", None)
        if cap:
            return int(cap)
    except Exception:
        pass
    return 64 * _MiB  # conservative fallback (v7x per-TC size); works everywhere


def _num_tensorcores():
    try:
        return max(1, int(getattr(jax.devices()[0], "num_cores", 1)))
    except Exception:
        return 1


def _ffn_kernel(x_ref, gamma_ref, beta_ref, w1t_ref, b1_ref, w2_ref, b2_ref,
                o_ref, h_ref, acc_ref, *, d, use_layernorm, high_precision):
    k = pl.program_id(1)
    prec = lax.Precision.HIGHEST if high_precision else None

    @pl.when(k == 0)
    def _():
        # LayerNorm computed once per token tile, cached (in compute dtype) for all ff-tiles.
        x = x_ref[...].astype(jnp.float32)
        if use_layernorm:
            inv_d = 1.0 / d
            mean = jnp.sum(x, axis=-1, keepdims=True) * inv_d
            centered = x - mean
            if d != x.shape[-1]:
                # padded lanes: mask them out of the variance (and of h)
                lane = lax.broadcasted_iota(jnp.int32, x.shape, 1)
                centered = jnp.where(lane < d, centered, 0.0)
            var = jnp.sum(centered * centered, axis=-1, keepdims=True) * inv_d
            h = centered * lax.rsqrt(var + LN_EPS)
            h = h * gamma_ref[...] + beta_ref[...]
        else:
            h = x
        h_ref[...] = h.astype(h_ref.dtype)
        acc_ref[...] = jnp.zeros_like(acc_ref)

    # Linear1 ff-block: (tile_t, d_pad) x (tile_f, d_pad)^T -> (tile_t, tile_f),
    # native-dtype MXU operands, f32 accumulation.
    h1 = lax.dot_general(h_ref[...], w1t_ref[...],
                         dimension_numbers=(((1,), (1,)), ((), ())),
                         preferred_element_type=jnp.float32,
                         precision=prec)
    h1 = jnp.maximum(h1 + b1_ref[...], 0.0)

    # Linear2 ff-block: partial sum over the ff axis into the f32 accumulator.
    acc_ref[...] += jnp.dot(h1.astype(w2_ref.dtype), w2_ref[...],
                            preferred_element_type=jnp.float32,
                            precision=prec)

    @pl.when(k == pl.num_programs(1) - 1)
    def _():
        y = acc_ref[...] + b2_ref[...] + x_ref[...].astype(jnp.float32)
        o_ref[...] = y.astype(o_ref.dtype)


def prepare_params(params, compute_dtype=jnp.bfloat16):
    """One-time prep: pad to lane-dense multiples of 128, transpose w1, cast MXU operands.

    Keeps weight padding / dtype conversion out of the per-call path.
    """
    d, f = params["w1"].shape
    d_pad = _round_up(d, 128)
    f_pad = _round_up(f, 128)
    cdtype = jnp.dtype(compute_dtype)

    w1 = jnp.pad(params["w1"], ((0, d_pad - d), (0, f_pad - f)))
    w2 = jnp.pad(params["w2"], ((0, f_pad - f), (0, d_pad - d)))

    return {
        "d": d, "f": f, "d_pad": d_pad, "f_pad": f_pad, "compute_dtype": cdtype,
        "gamma": jnp.pad(params["gamma"].astype(jnp.float32), (0, d_pad - d)).reshape(1, d_pad),
        "beta": jnp.pad(params["beta"].astype(jnp.float32), (0, d_pad - d)).reshape(1, d_pad),
        # transposed -> each (tile_f, d_pad) ff-block is a contiguous row slab
        "w1t": jnp.asarray(w1.T, dtype=cdtype),
        "b1": jnp.pad(params["b1"].astype(jnp.float32), (0, f_pad - f)).reshape(1, f_pad),
        "w2": jnp.asarray(w2, dtype=cdtype),
        "b2": jnp.pad(params["b2"].astype(jnp.float32), (0, d_pad - d)).reshape(1, d_pad),
    }


def transformer_ff_layers(x, prep, *, use_layernorm=True, tile_t=None, tile_f=None):
    """x: (..., res_dim). prep: output of prepare_params()."""
    d, d_pad, f_pad = prep["d"], prep["d_pad"], prep["f_pad"]
    cdtype = prep["compute_dtype"]
    assert x.shape[-1] == d

    orig_shape = x.shape
    x2d = x.reshape(-1, d)
    t = x2d.shape[0]

    x_bytes = jnp.dtype(x.dtype).itemsize
    c_bytes = cdtype.itemsize
    sublane = {4: 8, 2: 16, 1: 32}.get(c_bytes, 8)

    cap = _vmem_capacity_bytes()
    budget = max(cap - 16 * _MiB, cap // 2)

    def need(tt, tf):
        n = 0
        n += 2 * tt * d_pad * x_bytes            # x tiles (double-buffered)
        n += 2 * tt * d_pad * x_bytes            # out tiles
        n += 2 * 2 * tf * d_pad * c_bytes        # w1t + w2 ff-blocks (double-buffered)
        n += 2 * tf * 4                          # b1 ff-block
        n += 3 * 2 * d_pad * 4                   # gamma / beta / b2 (resident)
        n += tt * d_pad * c_bytes                # cached LN output scratch
        n += tt * d_pad * 4                      # f32 accumulator scratch
        return n

    if tile_t is None or tile_f is None:
        t_cap = _round_up(min(t, 1024), sublane)
        tt_cands = sorted({_round_up(min(c, t_cap), sublane)
                           for c in (1024, 768, 512, 384, 256, 192, 128, 64, 32, 16, 8)},
                          reverse=True)
        tf_cands = [f_pad] + [c for c in (2048, 1024, 512, 256, 128)
                              if c < f_pad and f_pad % c == 0]
        sel_tt, sel_tf = sublane, 128 if f_pad % 128 == 0 else f_pad
        done = False
        for tt in tt_cands:
            for tf in tf_cands:
                if need(tt, tf) <= budget:
                    sel_tt, sel_tf = tt, tf
                    done = True
                    break
            if done:
                break
        if tile_t is None:
            tile_t = sel_tt
        if tile_f is None:
            tile_f = sel_tf

    tile_t = _round_up(tile_t, sublane)
    assert f_pad % tile_f == 0 and tile_f % 128 == 0

    # Two visible TensorCores + single token tile -> split so the "parallel" axis has 2 steps.
    if (_num_tensorcores() >= 2 and tile_t >= 2 * sublane
            and _round_up(t, tile_t) // tile_t == 1):
        tile_t = _round_up(tile_t // 2, sublane)

    t_pad = _round_up(t, tile_t)
    grid = (t_pad // tile_t, f_pad // tile_f)

    if (t_pad, d_pad) != (t, d):
        x_p = jnp.pad(x2d, ((0, t_pad - t), (0, d_pad - d)))
    else:
        x_p = x2d

    vmem_need = need(tile_t, tile_f)
    vmem_limit = int(min(cap - 2 * _MiB, max(2 * vmem_need + 8 * _MiB, 32 * _MiB)))

    kernel = functools.partial(_ffn_kernel, d=d, use_layernorm=use_layernorm,
                               high_precision=(c_bytes == 4))

    out = pl.pallas_call(
        kernel,
        out_shape=jax.ShapeDtypeStruct((t_pad, d_pad), x.dtype),
        grid_spec=pltpu.PrefetchScalarGridSpec(
            num_scalar_prefetch=0,
            grid=grid,
            in_specs=[
                pl.BlockSpec((tile_t, d_pad), lambda i, k: (i, 0)),    # x token tile
                pl.BlockSpec((1, d_pad), lambda i, k: (0, 0)),         # gamma (resident)
                pl.BlockSpec((1, d_pad), lambda i, k: (0, 0)),         # beta (resident)
                pl.BlockSpec((tile_f, d_pad), lambda i, k: (k, 0)),    # w1^T ff-block (contiguous slab)
                pl.BlockSpec((1, tile_f), lambda i, k: (0, k)),        # b1 ff-block
                pl.BlockSpec((tile_f, d_pad), lambda i, k: (k, 0)),    # w2 ff-block (contiguous slab)
                pl.BlockSpec((1, d_pad), lambda i, k: (0, 0)),         # b2 (resident)
            ],
            out_specs=pl.BlockSpec((tile_t, d_pad), lambda i, k: (i, 0)),
            scratch_shapes=[
                pltpu.VMEM((tile_t, d_pad), cdtype),       # cached LayerNorm output
                pltpu.VMEM((tile_t, d_pad), jnp.float32),  # f32 accumulator
            ],
        ),
        compiler_params=pltpu.CompilerParams(
            dimension_semantics=("parallel", "arbitrary"),
            vmem_limit_bytes=vmem_limit,
        ),
    )(x_p, prep["gamma"], prep["beta"], prep["w1t"], prep["b1"], prep["w2"], prep["b2"])

    if (t_pad, d_pad) != (t, d):
        out = out[:t, :d]
    return out.reshape(orig_shape)


def init_params(key, res_dim, ff_dim, dtype=jnp.float32):
    """Mirrors nn.Linear (uniform +/- 1/sqrt(fan_in)) and nn.LayerNorm (gamma=1, beta=0)."""
    k1, k2, k3, k4 = jax.random.split(key, 4)
    lim1 = 1.0 / (res_dim ** 0.5)
    lim2 = 1.0 / (ff_dim ** 0.5)
    return {
        "gamma": jnp.ones((res_dim,), dtype),
        "beta": jnp.zeros((res_dim,), dtype),
        "w1": jax.random.uniform(k1, (res_dim, ff_dim), dtype, -lim1, lim1),
        "b1": jax.random.uniform(k2, (ff_dim,), dtype, -lim1, lim1),
        "w2": jax.random.uniform(k3, (ff_dim, res_dim), dtype, -lim2, lim2),
        "b2": jax.random.uniform(k4, (res_dim,), dtype, -lim2, lim2),
    }


def _reference(x, p, use_layernorm=True):
    if use_layernorm:
        mean = jnp.mean(x, axis=-1, keepdims=True)
        var = jnp.mean((x - mean) ** 2, axis=-1, keepdims=True)
        h = (x - mean) / jnp.sqrt(var + LN_EPS) * p["gamma"] + p["beta"]
    else:
        h = x
    h = jnp.maximum(h @ p["w1"] + p["b1"], 0.0)
    return h @ p["w2"] + p["b2"] + x


if __name__ == "__main__":
    key = jax.random.PRNGKey(0)
    k_x, k_p = jax.random.split(key)

    batch, seq, res_dim, ff_dim = 2, 8, 32, 64
    x = jax.random.normal(k_x, (batch, seq, res_dim), jnp.float32)
    params = init_params(k_p, res_dim, ff_dim)
    ref = _reference(x, params)

    # Exact-math path (f32 MXU operands, Precision.HIGHEST).
    prep32 = prepare_params(params, compute_dtype=jnp.float32)
    out32 = jax.block_until_ready(transformer_ff_layers(x, prep32, use_layernorm=True))
    assert out32.shape == x.shape
    assert jnp.allclose(out32, ref, atol=1e-4, rtol=1e-4)

    # Default fast path (bf16 MXU operands) -- looser tolerance from weight/activation quant.
    prep16 = prepare_params(params)  # bf16 default
    out16 = jax.block_until_ready(transformer_ff_layers(x, prep16, use_layernorm=True))
    assert out16.shape == x.shape
    assert jnp.allclose(out16, ref, atol=1e-1, rtol=5e-2)

    # no-layernorm path
    out_nln = jax.block_until_ready(
        transformer_ff_layers(x, prep32, use_layernorm=False))
    ref_nln = _reference(x, params, use_layernorm=False)
    assert jnp.allclose(out_nln, ref_nln, atol=1e-4, rtol=1e-4)

    print("KERNEL_OK")
</pallas_src>

<mosaic_0001>
module attributes {stable_mosaic.version = 11 : i64} {
  func.func @_ffn_kernel(%arg0: i32, %arg1: i32, %arg2: memref<16x128xf32, #tpu.memory_space<vmem>>, %arg3: memref<1x128xf32, #tpu.memory_space<vmem>>, %arg4: memref<1x128xf32, #tpu.memory_space<vmem>>, %arg5: memref<128x128xf32, #tpu.memory_space<vmem>>, %arg6: memref<1x128xf32, #tpu.memory_space<vmem>>, %arg7: memref<128x128xf32, #tpu.memory_space<vmem>>, %arg8: memref<1x128xf32, #tpu.memory_space<vmem>>, %arg9: memref<16x128xf32, #tpu.memory_space<vmem>>, %arg10: memref<16x128xf32, #tpu.memory_space<vmem>>, %arg11: memref<16x128xf32, #tpu.memory_space<vmem>>) attributes {dimension_semantics = [#tpu.dimension_semantics<parallel>, #tpu.dimension_semantics<arbitrary>], iteration_bounds = array<i64: 1, 1>, scalar_prefetch = 0 : i64, scratch_operands = 2 : i64, tpu.core_type = #tpu.core_type<tc>, window_params = [{transform_indices = @transform_0, window_bounds = array<i64: 16, 128>}, {pipeline_mode = #tpu.pipeline_mode<synchronous>, transform_indices = @transform_1, window_bounds = array<i64: 1, 128>}, {pipeline_mode = #tpu.pipeline_mode<synchronous>, transform_indices = @transform_2, window_bounds = array<i64: 1, 128>}, {transform_indices = @transform_3, window_bounds = array<i64: 128, 128>}, {transform_indices = @transform_4, window_bounds = array<i64: 1, 128>}, {transform_indices = @transform_5, window_bounds = array<i64: 128, 128>}, {pipeline_mode = #tpu.pipeline_mode<synchronous>, transform_indices = @transform_6, window_bounds = array<i64: 1, 128>}, {transform_indices = @transform_7, window_bounds = array<i64: 16, 128>}]} {
    %c0_i32 = arith.constant 0 : i32
    %0 = arith.cmpi eq, %arg1, %c0_i32 : i32
    %1 = arith.extui %0 : i1 to i32
    %c0_i32_0 = arith.constant 0 : i32
    %2 = arith.cmpi ne, %1, %c0_i32_0 : i32
    scf.if %2 {
      %c0_16 = arith.constant 0 : index
      %c0_17 = arith.constant 0 : index
      %19 = vector.load %arg2[%c0_16, %c0_17] : memref<16x128xf32, #tpu.memory_space<vmem>>, vector<16x128xf32>
      %cst_18 = arith.constant dense<0.000000e+00> : vector<16xf32>
      %20 = vector.multi_reduction <add>, %19, %cst_18 [1] : vector<16x128xf32> to vector<16xf32>
      %21 = vector.shape_cast %20 : vector<16xf32> to vector<16x1xf32>
      %cst_19 = arith.constant 3.125000e-02 : f32
      %22 = vector.broadcast %cst_19 : f32 to vector<16x1xf32>
      %23 = arith.mulf %21, %22 : vector<16x1xf32>
      %24 = vector.broadcast %23 : vector<16x1xf32> to vector<16x128xf32>
      %25 = arith.subf %19, %24 : vector<16x128xf32>
      %26 = tpu.iota {dimensions = array<i32: 1>} : vector<16x128xi32>
      %c32_i32 = arith.constant 32 : i32
      %27 = vector.broadcast %c32_i32 : i32 to vector<16x128xi32>
      %28 = arith.cmpi slt, %26, %27 : vector<16x128xi32>
      %cst_20 = arith.constant 0.000000e+00 : f32
      %29 = vector.broadcast %cst_20 : f32 to vector<16x128xf32>
      %30 = arith.select %28, %25, %29 : vector<16x128xi1>, vector<16x128xf32>
      %31 = arith.mulf %30, %30 : vector<16x128xf32>
      %cst_21 = arith.constant dense<0.000000e+00> : vector<16xf32>
      %32 = vector.multi_reduction <add>, %31, %cst_21 [1] : vector<16x128xf32> to vector<16xf32>
      %33 = vector.shape_cast %32 : vector<16xf32> to vector<16x1xf32>
      %cst_22 = arith.constant 3.125000e-02 : f32
      %34 = vector.broadcast %cst_22 : f32 to vector<16x1xf32>
      %35 = arith.mulf %33, %34 : vector<16x1xf32>
      %cst_23 = arith.constant 9.99999974E-6 : f32
      %36 = vector.broadcast %cst_23 : f32 to vector<16x1xf32>
      %37 = arith.addf %35, %36 : vector<16x1xf32>
      %38 = math.rsqrt %37 : vector<16x1xf32>
      %39 = vector.broadcast %38 : vector<16x1xf32> to vector<16x128xf32>
      %40 = arith.mulf %30, %39 : vector<16x128xf32>
      %c0_24 = arith.constant 0 : index
      %c0_25 = arith.constant 0 : index
      %41 = vector.load %arg3[%c0_24, %c0_25] : memref<1x128xf32, #tpu.memory_space<vmem>>, vector<1x128xf32>
      %42 = vector.broadcast %41 : vector<1x128xf32> to vector<16x128xf32>
      %43 = arith.mulf %40, %42 : vector<16x128xf32>
      %c0_26 = arith.constant 0 : index
      %c0_27 = arith.constant 0 : index
      %44 = vector.load %arg4[%c0_26, %c0_27] : memref<1x128xf32, #tpu.memory_space<vmem>>, vector<1x128xf32>
      %45 = vector.broadcast %44 : vector<1x128xf32> to vector<16x128xf32>
      %46 = arith.addf %43, %45 : vector<16x128xf32>
      %c0_28 = arith.constant 0 : index
      %c0_29 = arith.constant 0 : index
      %47 = vector.load %arg10[%c0_28, %c0_29] : memref<16x128xf32, #tpu.memory_space<vmem>>, vector<16x128xf32>
      tpu.vector_store %arg10[%c0_28, %c0_29], %46 {strides = array<i32>} : memref<16x128xf32, #tpu.memory_space<vmem>>, vector<16x128xf32>,
      %cst_30 = arith.constant 0.000000e+00 : f32
      %48 = vector.broadcast %cst_30 : f32 to vector<16x128xf32>
      %c0_31 = arith.constant 0 : index
      %c0_32 = arith.constant 0 : index
      %49 = vector.load %arg11[%c0_31, %c0_32] : memref<16x128xf32, #tpu.memory_space<vmem>>, vector<16x128xf32>
      tpu.vector_store %arg11[%c0_31, %c0_32], %48 {strides = array<i32>} : memref<16x128xf32, #tpu.memory_space<vmem>>, vector<16x128xf32>,
    } else {
    }
    %c0 = arith.constant 0 : index
    %c0_1 = arith.constant 0 : index
    %3 = vector.load %arg10[%c0, %c0_1] : memref<16x128xf32, #tpu.memory_space<vmem>>, vector<16x128xf32>
    %c0_2 = arith.constant 0 : index
    %c0_3 = arith.constant 0 : index
    %4 = vector.load %arg5[%c0_2, %c0_3] : memref<128x128xf32, #tpu.memory_space<vmem>>, vector<128x128xf32>
    %cst = arith.constant dense<0.000000e+00> : vector<16x128xf32>
    %5 = tpu.matmul %3, %4, %cst {dimension_numbers = #tpu.dot_dimension_numbers<[1], [1], [0], [0], [0, 0, 1, 0], [], []>, precision = #tpu.contract_precision<fp32>} : vector<16x128xf32>, vector<128x128xf32>, vector<16x128xf32> -> vector<16x128xf32>
    %c0_4 = arith.constant 0 : index
    %c0_5 = arith.constant 0 : index
    %6 = vector.load %arg6[%c0_4, %c0_5] : memref<1x128xf32, #tpu.memory_space<vmem>>, vector<1x128xf32>
    %7 = vector.broadcast %6 : vector<1x128xf32> to vector<16x128xf32>
    %8 = arith.addf %5, %7 : vector<16x128xf32>
    %cst_6 = arith.constant 0.000000e+00 : f32
    %9 = vector.broadcast %cst_6 : f32 to vector<16x128xf32>
    %10 = arith.maximumf %8, %9 : vector<16x128xf32>
    %c0_7 = arith.constant 0 : index
    %c0_8 = arith.constant 0 : index
    %11 = vector.load %arg11[%c0_7, %c0_8] : memref<16x128xf32, #tpu.memory_space<vmem>>, vector<16x128xf32>
    %c0_9 = arith.constant 0 : index
    %c0_10 = arith.constant 0 : index
    %12 = vector.load %arg7[%c0_9, %c0_10] : memref<128x128xf32, #tpu.memory_space<vmem>>, vector<128x128xf32>
    %cst_11 = arith.constant dense<0.000000e+00> : vector<16x128xf32>
    %13 = tpu.matmul %10, %12, %cst_11 {dimension_numbers = #tpu.dot_dimension_numbers<[1], [0], [0], [1], [0, 0, 1, 1], [], []>, precision = #tpu.contract_precision<fp32>} : vector<16x128xf32>, vector<128x128xf32>, vector<16x128xf32> -> vector<16x128xf32>
    %14 = arith.addf %11, %13 : vector<16x128xf32>
    %c0_12 = arith.constant 0 : index
    %c0_13 = arith.constant 0 : index
    %15 = vector.load %arg11[%c0_12, %c0_13] : memref<16x128xf32, #tpu.memory_space<vmem>>, vector<16x128xf32>
    tpu.vector_store %arg11[%c0_12, %c0_13], %14 {strides = array<i32>} : memref<16x128xf32, #tpu.memory_space<vmem>>, vector<16x128xf32>,
    %c0_i32_14 = arith.constant 0 : i32
    %16 = arith.cmpi eq, %arg1, %c0_i32_14 : i32
    %17 = arith.extui %16 : i1 to i32
    %c0_i32_15 = arith.constant 0 : i32
    %18 = arith.cmpi ne, %17, %c0_i32_15 : i32
    scf.if %18 {
      %c0_16 = arith.constant 0 : index
      %c0_17 = arith.constant 0 : index
      %19 = vector.load %arg11[%c0_16, %c0_17] : memref<16x128xf32, #tpu.memory_space<vmem>>, vector<16x128xf32>
      %c0_18 = arith.constant 0 : index
      %c0_19 = arith.constant 0 : index
      %20 = vector.load %arg8[%c0_18, %c0_19] : memref<1x128xf32, #tpu.memory_space<vmem>>, vector<1x128xf32>
      %21 = vector.broadcast %20 : vector<1x128xf32> to vector<16x128xf32>
      %22 = arith.addf %19, %21 : vector<16x128xf32>
      %c0_20 = arith.constant 0 : index
      %c0_21 = arith.constant 0 : index
      %23 = vector.load %arg2[%c0_20, %c0_21] : memref<16x128xf32, #tpu.memory_space<vmem>>, vector<16x128xf32>
      %24 = arith.addf %22, %23 : vector<16x128xf32>
      %c0_22 = arith.constant 0 : index
      %c0_23 = arith.constant 0 : index
      %25 = vector.load %arg9[%c0_22, %c0_23] : memref<16x128xf32, #tpu.memory_space<vmem>>, vector<16x128xf32>
      tpu.vector_store %arg9[%c0_22, %c0_23], %24 {strides = array<i32>} : memref<16x128xf32, #tpu.memory_space<vmem>>, vector<16x128xf32>,
    } else {
    }
    return
  }
  func.func @transform_0(%arg0: i32, %arg1: i32) -> (i32, i32) {
    %c0_i32 = arith.constant 0 : i32
    %c0_i32_0 = arith.constant 0 : i32
    return %arg0, %c0_i32 : i32, i32
  }
  func.func @transform_1(%arg0: i32, %arg1: i32) -> (i32, i32) {
    %c0_i32 = arith.constant 0 : i32
    %c0_i32_0 = arith.constant 0 : i32
    %c0_i32_1 = arith.constant 0 : i32
    return %c0_i32, %c0_i32_0 : i32, i32
  }
  func.func @transform_2(%arg0: i32, %arg1: i32) -> (i32, i32) {
    %c0_i32 = arith.constant 0 : i32
    %c0_i32_0 = arith.constant 0 : i32
    %c0_i32_1 = arith.constant 0 : i32
    return %c0_i32, %c0_i32_0 : i32, i32
  }
  func.func @transform_3(%arg0: i32, %arg1: i32) -> (i32, i32) {
    %c0_i32 = arith.constant 0 : i32
    %c0_i32_0 = arith.constant 0 : i32
    return %arg1, %c0_i32 : i32, i32
  }
  func.func @transform_4(%arg0: i32, %arg1: i32) -> (i32, i32) {
    %c0_i32 = arith.constant 0 : i32
    %c0_i32_0 = arith.constant 0 : i32
    return %c0_i32, %arg1 : i32, i32
  }
  func.func @transform_5(%arg0: i32, %arg1: i32) -> (i32, i32) {
    %c0_i32 = arith.constant 0 : i32
    %c0_i32_0 = arith.constant 0 : i32
    return %arg1, %c0_i32 : i32, i32
  }
  func.func @transform_6(%arg0: i32, %arg1: i32) -> (i32, i32) {
    %c0_i32 = arith.constant 0 : i32
    %c0_i32_0 = arith.constant 0 : i32
    %c0_i32_1 = arith.constant 0 : i32
    return %c0_i32, %c0_i32_0 : i32, i32
  }
  func.func @transform_7(%arg0: i32, %arg1: i32) -> (i32, i32) {
    %c0_i32 = arith.constant 0 : i32
    %c0_i32_0 = arith.constant 0 : i32
    return %arg0, %c0_i32 : i32, i32
  }
}

</mosaic_0001>

<llo_original>
// kernel: tpu_custom_call.1
$region0: #{tpu_custom_call.1}
  #allocation0 [shape = 'u32[]', space=smem, size = 0x4, offset = 0x4, fixed_abs, tag = 'smem constant byte address 0x4 - core index']
  #allocation1 [shape = 'u32[144,128]{1,0:T(1,128)}', space=vmem, size = 0x12000, scoped, tag = 'internal scratch']
  #allocation2 [shape = 'f32[16,128]{1,0:T(8,128)}', space=vmem, size = 0x2000, scoped, tag = 'scratch operand']
  #allocation3 [shape = 'f32[16,128]{1,0:T(8,128)}', space=vmem, size = 0x2000, scoped, tag = 'scratch operand']
  %s0 = inlined_call_operand.hbm [shape: f32[16,128], index: 0, kind: input, shape index: {}]
  %s1 = inlined_call_operand.vmem [shape: f32[1,128], index: 1, kind: input, shape index: {}]
  %s2 = inlined_call_operand.vmem [shape: f32[1,128], index: 2, kind: input, shape index: {}]
  %s3 = inlined_call_operand.hbm [shape: f32[128,128], index: 3, kind: input, shape index: {}]
  %s4 = inlined_call_operand.vmem [shape: f32[1,128], index: 4, kind: input, shape index: {}]
  %s5 = inlined_call_operand.hbm [shape: f32[128,128], index: 5, kind: input, shape index: {}]
  %s6 = inlined_call_operand.vmem [shape: f32[1,128], index: 6, kind: input, shape index: {}]
  %s7 = inlined_call_operand.hbm [shape: f32[16,128], index: 7, kind: output, shape index: {}]
  %s8 = sld [smem:[#allocation0]]
  $region58: #{tpu_custom_call.1} parent=0
    _
  %s10 = ssub.s32 1, %s8
  %s11 = scalar_select 0, %s10, %s8
  $region1: #{tpu_custom_call.1} parent=0
    #allocation4 [shape = 'u8[8192]{0}', space=vmem, size = 0x2000, scoped, tag = 'input window, operand 0, single buffered']
    #allocation5 [shape = 's32[1]{0}', space=sflag, size = 0x4, scoped, tag = 'scoped memory for tpu_custom_call.1']
    #allocation6 [shape = 's32[1]{0}', space=sflag, size = 0x4, scoped, tag = 'scoped memory for tpu_custom_call.1']
    #allocation7 [shape = 'u8[65536]{0}', space=vmem, size = 0x10000, scoped, tag = 'input window, operand 3, single buffered']
    #allocation8 [shape = 's32[1]{0}', space=sflag, size = 0x4, scoped, tag = 'scoped memory for tpu_custom_call.1']
    #allocation9 [shape = 'u8[65536]{0}', space=vmem, size = 0x10000, scoped, tag = 'input window, operand 5, single buffered']
    #allocation10 [shape = 'u8[8192]{0}', space=vmem, size = 0x2000, scoped, tag = 'output window, operand 0, single buffered']
    %12 = vsyncpa [#allocation5], 0
    %13 = vsyncpa [#allocation8], 0
    %14 = vsyncpa [#allocation6], 0
    // Predicated region
    $region2: #{tpu_custom_call.1} parent=1 // pred_check
      _
    $region3: #{tpu_custom_call.1} parent=1 // pred_check_branch
      %16 = sbr.rel (0) target = $region5
    $region4: #{tpu_custom_call.1} parent=1 // pred_region
      %s18 = ssub.s32 256, 256
      %19 = vsyncadd [#allocation5], %s18
      %s20 = sshll.u32 [#allocation4], 4
      %s21 = int_to_ptr.vmem [resolvable:$true] %s20
      %26 = dma.hbm_to_vmem [thread:$0]  %s0, 256, %s21, [#allocation5], 128, 128, 8
    $region5: #{tpu_custom_call.1} parent=1 // pred_fallthru
      _
    // Predicated region
    $region6: #{tpu_custom_call.1} parent=1 // pred_check
      _
    $region7: #{tpu_custom_call.1} parent=1 // pred_check_branch
      %28 = sbr.rel (0) target = $region9
    $region8: #{tpu_custom_call.1} parent=1 // pred_region
      _
    $region9: #{tpu_custom_call.1} parent=1 // pred_fallthru
      _
    // Predicated region
    $region10: #{tpu_custom_call.1} parent=1 // pred_check
      _
    $region11: #{tpu_custom_call.1} parent=1 // pred_check_branch
      %30 = sbr.rel (0) target = $region13
    $region12: #{tpu_custom_call.1} parent=1 // pred_region
      _
    $region13: #{tpu_custom_call.1} parent=1 // pred_fallthru
      _
    // Predicated region
    $region14: #{tpu_custom_call.1} parent=1 // pred_check
      _
    $region15: #{tpu_custom_call.1} parent=1 // pred_check_branch
      %32 = sbr.rel (0) target = $region17
    $region16: #{tpu_custom_call.1} parent=1 // pred_region
      %s34 = ssub.s32 2048, 2048
      %35 = vsyncadd [#allocation8], %s34
      %s36 = sshll.u32 [#allocation7], 4
      %s37 = int_to_ptr.vmem [resolvable:$true] %s36
      %42 = dma.hbm_to_vmem [thread:$0]  %s3, 2048, %s37, [#allocation8], 128, 128, 8
    $region17: #{tpu_custom_call.1} parent=1 // pred_fallthru
      _
    // Predicated region
    $region18: #{tpu_custom_call.1} parent=1 // pred_check
      _
    $region19: #{tpu_custom_call.1} parent=1 // pred_check_branch
      %44 = sbr.rel (0) target = $region21
    $region20: #{tpu_custom_call.1} parent=1 // pred_region
      _
    $region21: #{tpu_custom_call.1} parent=1 // pred_fallthru
      _
    // Predicated region
    $region22: #{tpu_custom_call.1} parent=1 // pred_check
      _
    $region23: #{tpu_custom_call.1} parent=1 // pred_check_branch
      %46 = sbr.rel (0) target = $region25
    $region24: #{tpu_custom_call.1} parent=1 // pred_region
      %s48 = ssub.s32 2048, 2048
      %49 = vsyncadd [#allocation8], %s48
      %s50 = sshll.u32 [#allocation9], 4
      %s51 = int_to_ptr.vmem [resolvable:$true] %s50
      %56 = dma.hbm_to_vmem [thread:$0]  %s5, 2048, %s51, [#allocation8], 128, 128, 8
    $region25: #{tpu_custom_call.1} parent=1 // pred_fallthru
      _
    // Predicated region
    $region26: #{tpu_custom_call.1} parent=1 // pred_check
      _
    $region27: #{tpu_custom_call.1} parent=1 // pred_check_branch
      %58 = sbr.rel (0) target = $region29
    $region28: #{tpu_custom_call.1} parent=1 // pred_region
      _
    $region29: #{tpu_custom_call.1} parent=1 // pred_fallthru
      _
    // Predicated region
    $region30: #{tpu_custom_call.1} parent=1 // pred_check
      _
    $region31: #{tpu_custom_call.1} parent=1 // pred_check_branch
      %60 = sbr.rel (0) target = $region33
    $region32: #{tpu_custom_call.1} parent=1 // pred_region
      %61 = dma.done [#allocation5], 256
    $region33: #{tpu_custom_call.1} parent=1 // pred_fallthru
      _
    // Predicated region
    $region34: #{tpu_custom_call.1} parent=1 // pred_check
      _
    $region35: #{tpu_custom_call.1} parent=1 // pred_check_branch
      %63 = sbr.rel (0) target = $region37
    $region36: #{tpu_custom_call.1} parent=1 // pred_region
      %64 = dma.done [#allocation8], 2048
    $region37: #{tpu_custom_call.1} parent=1 // pred_fallthru
      _
    // Predicated region
    $region38: #{tpu_custom_call.1} parent=1 // pred_check
      _
    $region39: #{tpu_custom_call.1} parent=1 // pred_check_branch
      %66 = sbr.rel (0) target = $region41
    $region40: #{tpu_custom_call.1} parent=1 // pred_region
      %67 = dma.done [#allocation8], 2048
    $region41: #{tpu_custom_call.1} parent=1 // pred_fallthru
      _
    %p68 = scmp.eq.s32.totalorder 0, 0
    // Predicated region
    $region42: #{tpu_custom_call.1} parent=1 // pred_check
      %p69 = pneg %p68
    $region43: #{tpu_custom_call.1} parent=1 // pred_check_branch
      %71 = sbr.rel (%p69) target = $region45
    $region44: #{tpu_custom_call.1} parent=1 // pred_region
      %v72 = vld [vmem:[#allocation4] sm:$0xff]
      %v73 = vld [vmem:[#allocation4 + $0x8] sm:$0xff]
      %74 = vadd.xlane.f32.xlu0 %v72
      %v75 = vpop.xlane.xlu0 %74
      %76 = vadd.xlane.f32.xlu0 %v73
      %v77 = vpop.xlane.xlu0 %76
      %v78 = vmul.f32 %v75, 0.03125
      %v79 = vmul.f32 %v77, 0.03125
      %v80 = vsub.f32 %v72, %v78
      %v81 = vsub.f32 %v73, %v79
      %v82 = vlaneseq
      %v83 = vand.u32 %v82, 127
      %vm84 = vcmp.lt.s32.totalorder %v83, 32
      %v85 = vsel %vm84, %v80, 0.0
      %v86 = vsel %vm84, %v81, 0.0
      %v87 = vmul.f32 %v85, %v85
      %v88 = vmul.f32 %v86, %v86
      %89 = vadd.xlane.f32.xlu0 %v87
      %v90 = vpop.xlane.xlu0 %89
      %91 = vadd.xlane.f32.xlu0 %v88
      %v92 = vpop.xlane.xlu0 %91
      %v93 = vmul.f32 %v90, 0.03125
      %v94 = vmul.f32 %v92, 0.03125
      %v95 = vadd.f32 %v93, 1e-05
      %v96 = vadd.f32 %v94, 1e-05
      %v97 = vrsqrt.pop %v95
      %v98 = vrsqrt.pop %v96
      %v99 = vmul.f32 %v85, %v97
      %v100 = vmul.f32 %v86, %v98
      %v101 = vld [vmem:[%s1] sm:$0x1]
      %v103 = vlaneseq
      %v104 = vshrl.u32 %v103, 7
      %v105 = vsub.s32 0, %v104
      %v106 = vrot.slane %v101, %v105
      %v108 = vmul.f32 %v99, %v106
      %v109 = vmul.f32 %v100, %v106
      %v110 = vld [vmem:[%s2] sm:$0x1]
      %v112 = vlaneseq
      %v113 = vshrl.u32 %v112, 7
      %v114 = vsub.s32 0, %v113
      %v115 = vrot.slane %v110, %v114
      %v117 = vadd.f32 %v108, %v115
      %v118 = vadd.f32 %v109, %v115
      %119 = vst [vmem:[#allocation2] sm:$0xff] %v117
      %120 = vst [vmem:[#allocation2 + $0x8] sm:$0xff] %v118
      %121 = vst [vmem:[#allocation3] sm:$0xff] 0.0
      %122 = vst [vmem:[#allocation3 + $0x8] sm:$0xff] 0.0
    $region45: #{tpu_custom_call.1} parent=1 // pred_fallthru
      _
    %v123 = vld [vmem:[#allocation2] sm:$0xff]
    %v124 = vld [vmem:[#allocation2 + $0x8] sm:$0xff]
    %v125 = vld [vmem:[#allocation7] sm:$0xff]
    %v126 = vld [vmem:[#allocation7 + $0x8] sm:$0xff]
    %v127 = vld [vmem:[#allocation7 + $0x10] sm:$0xff]
    %v128 = vld [vmem:[#allocation7 + $0x18] sm:$0xff]
    %v129 = vld [vmem:[#allocation7 + $0x20] sm:$0xff]
    %v130 = vld [vmem:[#allocation7 + $0x28] sm:$0xff]
    %v131 = vld [vmem:[#allocation7 + $0x30] sm:$0xff]
    %v132 = vld [vmem:[#allocation7 + $0x38] sm:$0xff]
    %v133 = vld [vmem:[#allocation7 + $0x40] sm:$0xff]
    %v134 = vld [vmem:[#allocation7 + $0x48] sm:$0xff]
    %v135 = vld [vmem:[#allocation7 + $0x50] sm:$0xff]
    %v136 = vld [vmem:[#allocation7 + $0x58] sm:$0xff]
    %v137 = vld [vmem:[#allocation7 + $0x60] sm:$0xff]
    %v138 = vld [vmem:[#allocation7 + $0x68] sm:$0xff]
    %v139 = vld [vmem:[#allocation7 + $0x70] sm:$0xff]
    %v140 = vld [vmem:[#allocation7 + $0x78] sm:$0xff]
    %v141 = vld [vmem:[%s4] sm:$0x1]
    %v143 = vlaneseq
    %v144 = vshrl.u32 %v143, 7
    %v145 = vsub.s32 0, %v144
    %v146 = vrot.slane %v141, %v145
    %148 = vmatprep.subr.mxu0 0.0
    %v149 = vand.u32 %v140, 4294901760
    %150 = vmatpush1.xpose.msra.mxu0 %v149
    %151 = vmatprep.subr.mxu0 0.0
    %v152 = vand.u32 %v139, 4294901760
    %153 = vmatpush1.xpose.msra.mxu0 %v152
    %154 = vmatprep.subr.mxu0 0.0
    %v155 = vand.u32 %v138, 4294901760
    %156 = vmatpush1.xpose.msra.mxu0 %v155
    %157 = vmatprep.subr.mxu0 0.0
    %v158 = vand.u32 %v137, 4294901760
    %159 = vmatpush1.xpose.msra.mxu0 %v158
    %160 = vmatprep.subr.mxu0 0.0
    %v161 = vand.u32 %v136, 4294901760
    %162 = vmatpush1.xpose.msra.mxu0 %v161
    %163 = vmatprep.subr.mxu0 0.0
    %v164 = vand.u32 %v135, 4294901760
    %165 = vmatpush1.xpose.msra.mxu0 %v164
    %166 = vmatprep.subr.mxu0 0.0
    %v167 = vand.u32 %v134, 4294901760
    %168 = vmatpush1.xpose.msra.mxu0 %v167
    %169 = vmatprep.subr.mxu0 0.0
    %v170 = vand.u32 %v133, 4294901760
    %171 = vmatpush1.xpose.msra.mxu0 %v170
    %172 = vmatprep.subr.mxu0 0.0
    %v173 = vand.u32 %v132, 4294901760
    %174 = vmatpush1.xpose.msra.mxu0 %v173
    %175 = vmatprep.subr.mxu0 0.0
    %v176 = vand.u32 %v131, 4294901760
    %177 = vmatpush1.xpose.msra.mxu0 %v176
    %178 = vmatprep.subr.mxu0 0.0
    %v179 = vand.u32 %v130, 4294901760
    %180 = vmatpush1.xpose.msra.mxu0 %v179
    %181 = vmatprep.subr.mxu0 0.0
    %v182 = vand.u32 %v129, 4294901760
    %183 = vmatpush1.xpose.msra.mxu0 %v182
    %184 = vmatprep.subr.mxu0 0.0
    %v185 = vand.u32 %v128, 4294901760
    %186 = vmatpush1.xpose.msra.mxu0 %v185
    %187 = vmatprep.subr.mxu0 0.0
    %v188 = vand.u32 %v127, 4294901760
    %189 = vmatpush1.xpose.msra.mxu0 %v188
    %190 = vmatprep.subr.mxu0 0.0
    %v191 = vand.u32 %v126, 4294901760
    %192 = vmatpush1.xpose.msra.mxu0 %v191
    %193 = vmatprep.subr.mxu0 0.0
    %v194 = vand.u32 %v125, 4294901760
    %195 = vmatpush1.xpose.msra.mxu0 %v194
    %196 = vmatprep.subr.mxu0 0.0
    %197 = vmatpush2.xpose.msra.mxu0 0.0
    %198 = vmatprep.subr.mxu0 0.0
    %199 = vmatpush2.xpose.msra.mxu0 0.0
    %200 = vmatprep.subr.mxu0 0.0
    %201 = vmatpush2.xpose.msra.mxu0 0.0
    %202 = vmatprep.subr.mxu0 0.0
    %203 = vmatpush2.xpose.msra.mxu0 0.0
    %204 = vmatprep.subr.mxu0 0.0
    %205 = vmatpush2.xpose.msra.mxu0 0.0
    %206 = vmatprep.subr.mxu0 0.0
    %207 = vmatpush2.xpose.msra.mxu0 0.0
    %208 = vmatprep.subr.mxu0 0.0
    %209 = vmatpush2.xpose.msra.mxu0 0.0
    %210 = vmatprep.subr.mxu0 0.0
    %211 = vmatpush2.xpose.msra.mxu0 0.0
    %212 = vmatprep.subr.mxu0 0.0
    %213 = vmatpush2.xpose.msra.mxu0 0.0
    %214 = vmatprep.subr.mxu0 0.0
    %215 = vmatpush2.xpose.msra.mxu0 0.0
    %216 = vmatprep.subr.mxu0 0.0
    %217 = vmatpush2.xpose.msra.mxu0 0.0
    %218 = vmatprep.subr.mxu0 0.0
    %219 = vmatpush2.xpose.msra.mxu0 0.0
    %220 = vmatprep.subr.mxu0 0.0
    %221 = vmatpush2.xpose.msra.mxu0 0.0
    %222 = vmatprep.subr.mxu0 0.0
    %223 = vmatpush2.xpose.msra.mxu0 0.0
    %224 = vmatprep.subr.mxu0 0.0
    %225 = vmatpush2.xpose.msra.mxu0 0.0
    %226 = vmatprep.subr.mxu0 0.0
    %227 = vmatpush2.xpose.msra.mxu0 0.0
    %228 = vmatprep.mubr.f32.mxu0 0.0
    %v229 = vand.u32 %v123, 4294901760
    %v230 = vsub.f32 %v123, %v229
    %v231 = vand.u32 %v230, 4294901760
    %v232 = vsub.f32 %v230, %v231
    %v233 = vand.u32 %v232, 4294901760
    %234 = vmatmul.mubr.f32.gmra.mxu0 %v233
    %v235 = vpop.f32.mrf.mxu0
    %v236 = vadd.f32 %v146, %v235
    %v237 = vpop.f32.mrf.mxu0
    %238 = vmatprep.mubr.f32.mxu0 0.0
    %v239 = vand.u32 %v124, 4294901760
    %v240 = vsub.f32 %v124, %v239
    %v241 = vand.u32 %v240, 4294901760
    %v242 = vsub.f32 %v240, %v241
    %v243 = vand.u32 %v242, 4294901760
    %244 = vmatmul.mubr.f32.gmra.mxu0 %v243
    %v245 = vpop.f32.mrf.mxu0
    %v246 = vadd.f32 %v146, %v245
    %v247 = vpop.f32.mrf.mxu0
    %248 = vdwg.mxu0
    %249 = vmatprep.subr.mxu0 0.0
    %v250 = vand.u32 %v140, 4294901760
    %v251 = vsub.f32 %v140, %v250
    %v252 = vand.u32 %v251, 4294901760
    %v253 = vsub.f32 %v251, %v252
    %v254 = vand.u32 %v253, 4294901760
    %255 = vmatpush1.xpose.msra.mxu0 %v254
    %256 = vmatprep.subr.mxu0 0.0
    %v257 = vand.u32 %v139, 4294901760
    %v258 = vsub.f32 %v139, %v257
    %v259 = vand.u32 %v258, 4294901760
    %v260 = vsub.f32 %v258, %v259
    %v261 = vand.u32 %v260, 4294901760
    %262 = vmatpush1.xpose.msra.mxu0 %v261
    %263 = vmatprep.subr.mxu0 0.0
    %v264 = vand.u32 %v138, 4294901760
    %v265 = vsub.f32 %v138, %v264
    %v266 = vand.u32 %v265, 4294901760
    %v267 = vsub.f32 %v265, %v266
    %v268 = vand.u32 %v267, 4294901760
    %269 = vmatpush1.xpose.msra.mxu0 %v268
    %270 = vmatprep.subr.mxu0 0.0
    %v271 = vand.u32 %v137, 4294901760
    %v272 = vsub.f32 %v137, %v271
    %v273 = vand.u32 %v272, 4294901760
    %v274 = vsub.f32 %v272, %v273
    %v275 = vand.u32 %v274, 4294901760
    %276 = vmatpush1.xpose.msra.mxu0 %v275
    %277 = vmatprep.subr.mxu0 0.0
    %v278 = vand.u32 %v136, 4294901760
    %v279 = vsub.f32 %v136, %v278
    %v280 = vand.u32 %v279, 4294901760
    %v281 = vsub.f32 %v279, %v280
    %v282 = vand.u32 %v281, 4294901760
    %283 = vmatpush1.xpose.msra.mxu0 %v282
    %284 = vmatprep.subr.mxu0 0.0
    %v285 = vand.u32 %v135, 4294901760
    %v286 = vsub.f32 %v135, %v285
    %v287 = vand.u32 %v286, 4294901760
    %v288 = vsub.f32 %v286, %v287
    %v289 = vand.u32 %v288, 4294901760
    %290 = vmatpush1.xpose.msra.mxu0 %v289
    %291 = vmatprep.subr.mxu0 0.0
    %v292 = vand.u32 %v134, 4294901760
    %v293 = vsub.f32 %v134, %v292
    %v294 = vand.u32 %v293, 4294901760
    %v295 = vsub.f32 %v293, %v294
    %v296 = vand.u32 %v295, 4294901760
    %297 = vmatpush1.xpose.msra.mxu0 %v296
    %298 = vmatprep.subr.mxu0 0.0
    %v299 = vand.u32 %v133, 4294901760
    %v300 = vsub.f32 %v133, %v299
    %v301 = vand.u32 %v300, 4294901760
    %v302 = vsub.f32 %v300, %v301
    %v303 = vand.u32 %v302, 4294901760
    %304 = vmatpush1.xpose.msra.mxu0 %v303
    %305 = vmatprep.subr.mxu0 0.0
    %v306 = vand.u32 %v132, 4294901760
    %v307 = vsub.f32 %v132, %v306
    %v308 = vand.u32 %v307, 4294901760
    %v309 = vsub.f32 %v307, %v308
    %v310 = vand.u32 %v309, 4294901760
    %311 = vmatpush1.xpose.msra.mxu0 %v310
    %312 = vmatprep.subr.mxu0 0.0
    %v313 = vand.u32 %v131, 4294901760
    %v314 = vsub.f32 %v131, %v313
    %v315 = vand.u32 %v314, 4294901760
    %v316 = vsub.f32 %v314, %v315
    %v317 = vand.u32 %v316, 4294901760
    %318 = vmatpush1.xpose.msra.mxu0 %v317
    %319 = vmatprep.subr.mxu0 0.0
    %v320 = vand.u32 %v130, 4294901760
    %v321 = vsub.f32 %v130, %v320
    %v322 = vand.u32 %v321, 4294901760
    %v323 = vsub.f32 %v321, %v322
    %v324 = vand.u32 %v323, 4294901760
    %325 = vmatpush1.xpose.msra.mxu0 %v324
    %326 = vmatprep.subr.mxu0 0.0
    %v327 = vand.u32 %v129, 4294901760
    %v328 = vsub.f32 %v129, %v327
    %v329 = vand.u32 %v328, 4294901760
    %v330 = vsub.f32 %v328, %v329
    %v331 = vand.u32 %v330, 4294901760
    %332 = vmatpush1.xpose.msra.mxu0 %v331
    %333 = vmatprep.subr.mxu0 0.0
    %v334 = vand.u32 %v128, 4294901760
    %v335 = vsub.f32 %v128, %v334
    %v336 = vand.u32 %v335, 4294901760
    %v337 = vsub.f32 %v335, %v336
    %v338 = vand.u32 %v337, 4294901760
    %339 = vmatpush1.xpose.msra.mxu0 %v338
    %340 = vmatprep.subr.mxu0 0.0
    %v341 = vand.u32 %v127, 4294901760
    %v342 = vsub.f32 %v127, %v341
    %v343 = vand.u32 %v342, 4294901760
    %v344 = vsub.f32 %v342, %v343
    %v345 = vand.u32 %v344, 4294901760
    %346 = vmatpush1.xpose.msra.mxu0 %v345
    %347 = vmatprep.subr.mxu0 0.0
    %v348 = vand.u32 %v126, 4294901760
    %v349 = vsub.f32 %v126, %v348
    %v350 = vand.u32 %v349, 4294901760
    %v351 = vsub.f32 %v349, %v350
    %v352 = vand.u32 %v351, 4294901760
    %353 = vmatpush1.xpose.msra.mxu0 %v352
    %354 = vmatprep.subr.mxu0 0.0
    %v355 = vand.u32 %v125, 4294901760
    %v356 = vsub.f32 %v125, %v355
    %v357 = vand.u32 %v356, 4294901760
    %v358 = vsub.f32 %v356, %v357
    %v359 = vand.u32 %v358, 4294901760
    %360 = vmatpush1.xpose.msra.mxu0 %v359
    %361 = vmatprep.subr.mxu0 0.0
    %362 = vmatpush2.xpose.msra.mxu0 0.0
    %363 = vmatprep.subr.mxu0 0.0
    %364 = vmatpush2.xpose.msra.mxu0 0.0
    %365 = vmatprep.subr.mxu0 0.0
    %366 = vmatpush2.xpose.msra.mxu0 0.0
    %367 = vmatprep.subr.mxu0 0.0
    %368 = vmatpush2.xpose.msra.mxu0 0.0
    %369 = vmatprep.subr.mxu0 0.0
    %370 = vmatpush2.xpose.msra.mxu0 0.0
    %371 = vmatprep.subr.mxu0 0.0
    %372 = vmatpush2.xpose.msra.mxu0 0.0
    %373 = vmatprep.subr.mxu0 0.0
    %374 = vmatpush2.xpose.msra.mxu0 0.0
    %375 = vmatprep.subr.mxu0 0.0
    %376 = vmatpush2.xpose.msra.mxu0 0.0
    %377 = vmatprep.subr.mxu0 0.0
    %378 = vmatpush2.xpose.msra.mxu0 0.0
    %379 = vmatprep.subr.mxu0 0.0
    %380 = vmatpush2.xpose.msra.mxu0 0.0
    %381 = vmatprep.subr.mxu0 0.0
    %382 = vmatpush2.xpose.msra.mxu0 0.0
    %383 = vmatprep.subr.mxu0 0.0
    %384 = vmatpush2.xpose.msra.mxu0 0.0
    %385 = vmatprep.subr.mxu0 0.0
    %386 = vmatpush2.xpose.msra.mxu0 0.0
    %387 = vmatprep.subr.mxu0 0.0
    %388 = vmatpush2.xpose.msra.mxu0 0.0
    %389 = vmatprep.subr.mxu0 0.0
    %390 = vmatpush2.xpose.msra.mxu0 0.0
    %391 = vmatprep.subr.mxu0 0.0
    %392 = vmatpush2.xpose.msra.mxu0 0.0
    %393 = vmatprep.mubr.f32.mxu0 0.0
    %v394 = vand.u32 %v123, 4294901760
    %395 = vmatmul.mubr.f32.gmra.mxu0 %v394
    %v396 = vpop.f32.mrf.mxu0
    %v397 = vadd.f32 %v236, %v396
    %v398 = vpop.f32.mrf.mxu0
    %399 = vmatprep.mubr.f32.mxu0 0.0
    %v400 = vand.u32 %v124, 4294901760
    %401 = vmatmul.mubr.f32.gmra.mxu0 %v400
    %v402 = vpop.f32.mrf.mxu0
    %v403 = vadd.f32 %v246, %v402
    %v404 = vpop.f32.mrf.mxu0
    %405 = vdwg.mxu0
    %406 = vmatprep.subr.mxu0 0.0
    %v407 = vand.u32 %v140, 4294901760
    %v408 = vsub.f32 %v140, %v407
    %409 = vmatpush1.xpose.msra.mxu0 %v408
    %410 = vmatprep.subr.mxu0 0.0
    %v411 = vand.u32 %v139, 4294901760
    %v412 = vsub.f32 %v139, %v411
    %413 = vmatpush1.xpose.msra.mxu0 %v412
    %414 = vmatprep.subr.mxu0 0.0
    %v415 = vand.u32 %v138, 4294901760
    %v416 = vsub.f32 %v138, %v415
    %417 = vmatpush1.xpose.msra.mxu0 %v416
    %418 = vmatprep.subr.mxu0 0.0
    %v419 = vand.u32 %v137, 4294901760
    %v420 = vsub.f32 %v137, %v419
    %421 = vmatpush1.xpose.msra.mxu0 %v420
    %422 = vmatprep.subr.mxu0 0.0
    %v423 = vand.u32 %v136, 4294901760
    %v424 = vsub.f32 %v136, %v423
    %425 = vmatpush1.xpose.msra.mxu0 %v424
    %426 = vmatprep.subr.mxu0 0.0
    %v427 = vand.u32 %v135, 4294901760
    %v428 = vsub.f32 %v135, %v427
    %429 = vmatpush1.xpose.msra.mxu0 %v428
    %430 = vmatprep.subr.mxu0 0.0
    %v431 = vand.u32 %v134, 4294901760
    %v432 = vsub.f32 %v134, %v431
    %433 = vmatpush1.xpose.msra.mxu0 %v432
    %434 = vmatprep.subr.mxu0 0.0
    %v435 = vand.u32 %v133, 4294901760
    %v436 = vsub.f32 %v133, %v435
    %437 = vmatpush1.xpose.msra.mxu0 %v436
    %438 = vmatprep.subr.mxu0 0.0
    %v439 = vand.u32 %v132, 4294901760
    %v440 = vsub.f32 %v132, %v439
    %441 = vmatpush1.xpose.msra.mxu0 %v440
    %442 = vmatprep.subr.mxu0 0.0
    %v443 = vand.u32 %v131, 4294901760
    %v444 = vsub.f32 %v131, %v443
    %445 = vmatpush1.xpose.msra.mxu0 %v444
    %446 = vmatprep.subr.mxu0 0.0
    %v447 = vand.u32 %v130, 4294901760
    %v448 = vsub.f32 %v130, %v447
    %449 = vmatpush1.xpose.msra.mxu0 %v448
    %450 = vmatprep.subr.mxu0 0.0
    %v451 = vand.u32 %v129, 4294901760
    %v452 = vsub.f32 %v129, %v451
    %453 = vmatpush1.xpose.msra.mxu0 %v452
    %454 = vmatprep.subr.mxu0 0.0
    %v455 = vand.u32 %v128, 4294901760
    %v456 = vsub.f32 %v128, %v455
    %457 = vmatpush1.xpose.msra.mxu0 %v456
    %458 = vmatprep.subr.mxu0 0.0
    %v459 = vand.u32 %v127, 4294901760
    %v460 = vsub.f32 %v127, %v459
    %461 = vmatpush1.xpose.msra.mxu0 %v460
    %462 = vmatprep.subr.mxu0 0.0
    %v463 = vand.u32 %v126, 4294901760
    %v464 = vsub.f32 %v126, %v463
    %465 = vmatpush1.xpose.msra.mxu0 %v464
    %466 = vmatprep.subr.mxu0 0.0
    %v467 = vand.u32 %v125, 4294901760
    %v468 = vsub.f32 %v125, %v467
    %469 = vmatpush1.xpose.msra.mxu0 %v468
    %470 = vmatprep.subr.mxu0 0.0
    %471 = vmatpush2.xpose.msra.mxu0 0.0
    %472 = vmatprep.subr.mxu0 0.0
    %473 = vmatpush2.xpose.msra.mxu0 0.0
    %474 = vmatprep.subr.mxu0 0.0
    %475 = vmatpush2.xpose.msra.mxu0 0.0
    %476 = vmatprep.subr.mxu0 0.0
    %477 = vmatpush2.xpose.msra.mxu0 0.0
    %478 = vmatprep.subr.mxu0 0.0
    %479 = vmatpush2.xpose.msra.mxu0 0.0
    %480 = vmatprep.subr.mxu0 0.0
    %481 = vmatpush2.xpose.msra.mxu0 0.0
    %482 = vmatprep.subr.mxu0 0.0
    %483 = vmatpush2.xpose.msra.mxu0 0.0
    %484 = vmatprep.subr.mxu0 0.0
    %485 = vmatpush2.xpose.msra.mxu0 0.0
    %486 = vmatprep.subr.mxu0 0.0
    %487 = vmatpush2.xpose.msra.mxu0 0.0
    %488 = vmatprep.subr.mxu0 0.0
    %489 = vmatpush2.xpose.msra.mxu0 0.0
    %490 = vmatprep.subr.mxu0 0.0
    %491 = vmatpush2.xpose.msra.mxu0 0.0
    %492 = vmatprep.subr.mxu0 0.0
    %493 = vmatpush2.xpose.msra.mxu0 0.0
    %494 = vmatprep.subr.mxu0 0.0
    %495 = vmatpush2.xpose.msra.mxu0 0.0
    %496 = vmatprep.subr.mxu0 0.0
    %497 = vmatpush2.xpose.msra.mxu0 0.0
    %498 = vmatprep.subr.mxu0 0.0
    %499 = vmatpush2.xpose.msra.mxu0 0.0
    %500 = vmatprep.subr.mxu0 0.0
    %501 = vmatpush2.xpose.msra.mxu0 0.0
    %502 = vmatprep.mubr.f32.mxu0 0.0
    %v503 = vand.u32 %v123, 4294901760
    %v504 = vsub.f32 %v123, %v503
    %505 = vmatmul.mubr.f32.gmra.mxu0 %v504
    %v506 = vpop.f32.mrf.mxu0
    %v507 = vadd.f32 %v397, %v506
    %v508 = vpop.f32.mrf.mxu0
    %509 = vmatprep.mubr.f32.mxu0 0.0
    %v510 = vand.u32 %v124, 4294901760
    %v511 = vsub.f32 %v124, %v510
    %512 = vmatmul.mubr.f32.gmra.mxu0 %v511
    %v513 = vpop.f32.mrf.mxu0
    %v514 = vadd.f32 %v403, %v513
    %v515 = vpop.f32.mrf.mxu0
    %516 = vdwg.mxu0
    %517 = vmatprep.subr.mxu0 0.0
    %v518 = vand.u32 %v140, 4294901760
    %519 = vmatpush1.xpose.msra.mxu0 %v518
    %520 = vmatprep.subr.mxu0 0.0
    %v521 = vand.u32 %v139, 4294901760
    %522 = vmatpush1.xpose.msra.mxu0 %v521
    %523 = vmatprep.subr.mxu0 0.0
    %v524 = vand.u32 %v138, 4294901760
    %525 = vmatpush1.xpose.msra.mxu0 %v524
    %526 = vmatprep.subr.mxu0 0.0
    %v527 = vand.u32 %v137, 4294901760
    %528 = vmatpush1.xpose.msra.mxu0 %v527
    %529 = vmatprep.subr.mxu0 0.0
    %v530 = vand.u32 %v136, 4294901760
    %531 = vmatpush1.xpose.msra.mxu0 %v530
    %532 = vmatprep.subr.mxu0 0.0
    %v533 = vand.u32 %v135, 4294901760
    %534 = vmatpush1.xpose.msra.mxu0 %v533
    %535 = vmatprep.subr.mxu0 0.0
    %v536 = vand.u32 %v134, 4294901760
    %537 = vmatpush1.xpose.msra.mxu0 %v536
    %538 = vmatprep.subr.mxu0 0.0
    %v539 = vand.u32 %v133, 4294901760
    %540 = vmatpush1.xpose.msra.mxu0 %v539
    %541 = vmatprep.subr.mxu0 0.0
    %v542 = vand.u32 %v132, 4294901760
    %543 = vmatpush1.xpose.msra.mxu0 %v542
    %544 = vmatprep.subr.mxu0 0.0
    %v545 = vand.u32 %v131, 4294901760
    %546 = vmatpush1.xpose.msra.mxu0 %v545
    %547 = vmatprep.subr.mxu0 0.0
    %v548 = vand.u32 %v130, 4294901760
    %549 = vmatpush1.xpose.msra.mxu0 %v548
    %550 = vmatprep.subr.mxu0 0.0
    %v551 = vand.u32 %v129, 4294901760
    %552 = vmatpush1.xpose.msra.mxu0 %v551
    %553 = vmatprep.subr.mxu0 0.0
    %v554 = vand.u32 %v128, 4294901760
    %555 = vmatpush1.xpose.msra.mxu0 %v554
    %556 = vmatprep.subr.mxu0 0.0
    %v557 = vand.u32 %v127, 4294901760
    %558 = vmatpush1.xpose.msra.mxu0 %v557
    %559 = vmatprep.subr.mxu0 0.0
    %v560 = vand.u32 %v126, 4294901760
    %561 = vmatpush1.xpose.msra.mxu0 %v560
    %562 = vmatprep.subr.mxu0 0.0
    %v563 = vand.u32 %v125, 4294901760
    %564 = vmatpush1.xpose.msra.mxu0 %v563
    %565 = vmatprep.subr.mxu0 0.0
    %566 = vmatpush2.xpose.msra.mxu0 0.0
    %567 = vmatprep.subr.mxu0 0.0
    %568 = vmatpush2.xpose.msra.mxu0 0.0
    %569 = vmatprep.subr.mxu0 0.0
    %570 = vmatpush2.xpose.msra.mxu0 0.0
    %571 = vmatprep.subr.mxu0 0.0
    %572 = vmatpush2.xpose.msra.mxu0 0.0
    %573 = vmatprep.subr.mxu0 0.0
    %574 = vmatpush2.xpose.msra.mxu0 0.0
    %575 = vmatprep.subr.mxu0 0.0
    %576 = vmatpush2.xpose.msra.mxu0 0.0
    %577 = vmatprep.subr.mxu0 0.0
    %578 = vmatpush2.xpose.msra.mxu0 0.0
    %579 = vmatprep.subr.mxu0 0.0
    %580 = vmatpush2.xpose.msra.mxu0 0.0
    %581 = vmatprep.subr.mxu0 0.0
    %582 = vmatpush2.xpose.msra.mxu0 0.0
    %583 = vmatprep.subr.mxu0 0.0
    %584 = vmatpush2.xpose.msra.mxu0 0.0
    %585 = vmatprep.subr.mxu0 0.0
    %586 = vmatpush2.xpose.msra.mxu0 0.0
    %587 = vmatprep.subr.mxu0 0.0
    %588 = vmatpush2.xpose.msra.mxu0 0.0
    %589 = vmatprep.subr.mxu0 0.0
    %590 = vmatpush2.xpose.msra.mxu0 0.0
    %591 = vmatprep.subr.mxu0 0.0
    %592 = vmatpush2.xpose.msra.mxu0 0.0
    %593 = vmatprep.subr.mxu0 0.0
    %594 = vmatpush2.xpose.msra.mxu0 0.0
    %595 = vmatprep.subr.mxu0 0.0
    %596 = vmatpush2.xpose.msra.mxu0 0.0
    %597 = vmatprep.mubr.f32.mxu0 0.0
    %v598 = vand.u32 %v123, 4294901760
    %v599 = vsub.f32 %v123, %v598
    %v600 = vand.u32 %v599, 4294901760
    %601 = vmatmul.mubr.f32.gmra.mxu0 %v600
    %v602 = vpop.f32.mrf.mxu0
    %v603 = vadd.f32 %v507, %v602
    %v604 = vpop.f32.mrf.mxu0
    %605 = vmatprep.mubr.f32.mxu0 0.0
    %v606 = vand.u32 %v124, 4294901760
    %v607 = vsub.f32 %v124, %v606
    %v608 = vand.u32 %v607, 4294901760
    %609 = vmatmul.mubr.f32.gmra.mxu0 %v608
    %v610 = vpop.f32.mrf.mxu0
    %v611 = vadd.f32 %v514, %v610
    %v612 = vpop.f32.mrf.mxu0
    %613 = vdwg.mxu0
    %614 = vmatprep.subr.mxu0 0.0
    %v615 = vand.u32 %v140, 4294901760
    %v616 = vsub.f32 %v140, %v615
    %v617 = vand.u32 %v616, 4294901760
    %618 = vmatpush1.xpose.msra.mxu0 %v617
    %619 = vmatprep.subr.mxu0 0.0
    %v620 = vand.u32 %v139, 4294901760
    %v621 = vsub.f32 %v139, %v620
    %v622 = vand.u32 %v621, 4294901760
    %623 = vmatpush1.xpose.msra.mxu0 %v622
    %624 = vmatprep.subr.mxu0 0.0
    %v625 = vand.u32 %v138, 4294901760
    %v626 = vsub.f32 %v138, %v625
    %v627 = vand.u32 %v626, 4294901760
    %628 = vmatpush1.xpose.msra.mxu0 %v627
    %629 = vmatprep.subr.mxu0 0.0
    %v630 = vand.u32 %v137, 4294901760
    %v631 = vsub.f32 %v137, %v630
    %v632 = vand.u32 %v631, 4294901760
    %633 = vmatpush1.xpose.msra.mxu0 %v632
    %634 = vmatprep.subr.mxu0 0.0
    %v635 = vand.u32 %v136, 4294901760
    %v636 = vsub.f32 %v136, %v635
    %v637 = vand.u32 %v636, 4294901760
    %638 = vmatpush1.xpose.msra.mxu0 %v637
    %639 = vmatprep.subr.mxu0 0.0
    %v640 = vand.u32 %v135, 4294901760
    %v641 = vsub.f32 %v135, %v640
    %v642 = vand.u32 %v641, 4294901760
    %643 = vmatpush1.xpose.msra.mxu0 %v642
    %644 = vmatprep.subr.mxu0 0.0
    %v645 = vand.u32 %v134, 4294901760
    %v646 = vsub.f32 %v134, %v645
    %v647 = vand.u32 %v646, 4294901760
    %648 = vmatpush1.xpose.msra.mxu0 %v647
    %649 = vmatprep.subr.mxu0 0.0
    %v650 = vand.u32 %v133, 4294901760
    %v651 = vsub.f32 %v133, %v650
    %v652 = vand.u32 %v651, 4294901760
    %653 = vmatpush1.xpose.msra.mxu0 %v652
    %654 = vmatprep.subr.mxu0 0.0
    %v655 = vand.u32 %v132, 4294901760
    %v656 = vsub.f32 %v132, %v655
    %v657 = vand.u32 %v656, 4294901760
    %658 = vmatpush1.xpose.msra.mxu0 %v657
    %659 = vmatprep.subr.mxu0 0.0
    %v660 = vand.u32 %v131, 4294901760
    %v661 = vsub.f32 %v131, %v660
    %v662 = vand.u32 %v661, 4294901760
    %663 = vmatpush1.xpose.msra.mxu0 %v662
    %664 = vmatprep.subr.mxu0 0.0
    %v665 = vand.u32 %v130, 4294901760
    %v666 = vsub.f32 %v130, %v665
    %v667 = vand.u32 %v666, 4294901760
    %668 = vmatpush1.xpose.msra.mxu0 %v667
    %669 = vmatprep.subr.mxu0 0.0
    %v670 = vand.u32 %v129, 4294901760
    %v671 = vsub.f32 %v129, %v670
    %v672 = vand.u32 %v671, 4294901760
    %673 = vmatpush1.xpose.msra.mxu0 %v672
    %674 = vmatprep.subr.mxu0 0.0
    %v675 = vand.u32 %v128, 4294901760
    %v676 = vsub.f32 %v128, %v675
    %v677 = vand.u32 %v676, 4294901760
    %678 = vmatpush1.xpose.msra.mxu0 %v677
    %679 = vmatprep.subr.mxu0 0.0
    %v680 = vand.u32 %v127, 4294901760
    %v681 = vsub.f32 %v127, %v680
    %v682 = vand.u32 %v681, 4294901760
    %683 = vmatpush1.xpose.msra.mxu0 %v682
    %684 = vmatprep.subr.mxu0 0.0
    %v685 = vand.u32 %v126, 4294901760
    %v686 = vsub.f32 %v126, %v685
    %v687 = vand.u32 %v686, 4294901760
    %688 = vmatpush1.xpose.msra.mxu0 %v687
    %689 = vmatprep.subr.mxu0 0.0
    %v690 = vand.u32 %v125, 4294901760
    %v691 = vsub.f32 %v125, %v690
    %v692 = vand.u32 %v691, 4294901760
    %693 = vmatpush1.xpose.msra.mxu0 %v692
    %694 = vmatprep.subr.mxu0 0.0
    %695 = vmatpush2.xpose.msra.mxu0 0.0
    %696 = vmatprep.subr.mxu0 0.0
    %697 = vmatpush2.xpose.msra.mxu0 0.0
    %698 = vmatprep.subr.mxu0 0.0
    %699 = vmatpush2.xpose.msra.mxu0 0.0
    %700 = vmatprep.subr.mxu0 0.0
    %701 = vmatpush2.xpose.msra.mxu0 0.0
    %702 = vmatprep.subr.mxu0 0.0
    %703 = vmatpush2.xpose.msra.mxu0 0.0
    %704 = vmatprep.subr.mxu0 0.0
    %705 = vmatpush2.xpose.msra.mxu0 0.0
    %706 = vmatprep.subr.mxu0 0.0
    %707 = vmatpush2.xpose.msra.mxu0 0.0
    %708 = vmatprep.subr.mxu0 0.0
    %709 = vmatpush2.xpose.msra.mxu0 0.0
    %710 = vmatprep.subr.mxu0 0.0
    %711 = vmatpush2.xpose.msra.mxu0 0.0
    %712 = vmatprep.subr.mxu0 0.0
    %713 = vmatpush2.xpose.msra.mxu0 0.0
    %714 = vmatprep.subr.mxu0 0.0
    %715 = vmatpush2.xpose.msra.mxu0 0.0
    %716 = vmatprep.subr.mxu0 0.0
    %717 = vmatpush2.xpose.msra.mxu0 0.0
    %718 = vmatprep.subr.mxu0 0.0
    %719 = vmatpush2.xpose.msra.mxu0 0.0
    %720 = vmatprep.subr.mxu0 0.0
    %721 = vmatpush2.xpose.msra.mxu0 0.0
    %722 = vmatprep.subr.mxu0 0.0
    %723 = vmatpush2.xpose.msra.mxu0 0.0
    %724 = vmatprep.subr.mxu0 0.0
    %725 = vmatpush2.xpose.msra.mxu0 0.0
    %726 = vmatprep.mubr.f32.mxu0 0.0
    %v727 = vand.u32 %v123, 4294901760
    %728 = vmatmul.mubr.f32.gmra.mxu0 %v727
    %v729 = vpop.f32.mrf.mxu0
    %v730 = vadd.f32 %v603, %v729
    %v731 = vpop.f32.mrf.mxu0
    %732 = vmatprep.mubr.f32.mxu0 0.0
    %v733 = vand.u32 %v124, 4294901760
    %734 = vmatmul.mubr.f32.gmra.mxu0 %v733
    %v735 = vpop.f32.mrf.mxu0
    %v736 = vadd.f32 %v611, %v735
    %v737 = vpop.f32.mrf.mxu0
    %738 = vdwg.mxu0
    %739 = vmatprep.subr.mxu0 0.0
    %v740 = vand.u32 %v140, 4294901760
    %741 = vmatpush1.xpose.msra.mxu0 %v740
    %742 = vmatprep.subr.mxu0 0.0
    %v743 = vand.u32 %v139, 4294901760
    %744 = vmatpush1.xpose.msra.mxu0 %v743
    %745 = vmatprep.subr.mxu0 0.0
    %v746 = vand.u32 %v138, 4294901760
    %747 = vmatpush1.xpose.msra.mxu0 %v746
    %748 = vmatprep.subr.mxu0 0.0
    %v749 = vand.u32 %v137, 4294901760
    %750 = vmatpush1.xpose.msra.mxu0 %v749
    %751 = vmatprep.subr.mxu0 0.0
    %v752 = vand.u32 %v136, 4294901760
    %753 = vmatpush1.xpose.msra.mxu0 %v752
    %754 = vmatprep.subr.mxu0 0.0
    %v755 = vand.u32 %v135, 4294901760
    %756 = vmatpush1.xpose.msra.mxu0 %v755
    %757 = vmatprep.subr.mxu0 0.0
    %v758 = vand.u32 %v134, 4294901760
    %759 = vmatpush1.xpose.msra.mxu0 %v758
    %760 = vmatprep.subr.mxu0 0.0
    %v761 = vand.u32 %v133, 4294901760
    %762 = vmatpush1.xpose.msra.mxu0 %v761
    %763 = vmatprep.subr.mxu0 0.0
    %v764 = vand.u32 %v132, 4294901760
    %765 = vmatpush1.xpose.msra.mxu0 %v764
    %766 = vmatprep.subr.mxu0 0.0
    %v767 = vand.u32 %v131, 4294901760
    %768 = vmatpush1.xpose.msra.mxu0 %v767
    %769 = vmatprep.subr.mxu0 0.0
    %v770 = vand.u32 %v130, 4294901760
    %771 = vmatpush1.xpose.msra.mxu0 %v770
    %772 = vmatprep.subr.mxu0 0.0
    %v773 = vand.u32 %v129, 4294901760
    %774 = vmatpush1.xpose.msra.mxu0 %v773
    %775 = vmatprep.subr.mxu0 0.0
    %v776 = vand.u32 %v128, 4294901760
    %777 = vmatpush1.xpose.msra.mxu0 %v776
    %778 = vmatprep.subr.mxu0 0.0
    %v779 = vand.u32 %v127, 4294901760
    %780 = vmatpush1.xpose.msra.mxu0 %v779
    %781 = vmatprep.subr.mxu0 0.0
    %v782 = vand.u32 %v126, 4294901760
    %783 = vmatpush1.xpose.msra.mxu0 %v782
    %784 = vmatprep.subr.mxu0 0.0
    %v785 = vand.u32 %v125, 4294901760
    %786 = vmatpush1.xpose.msra.mxu0 %v785
    %787 = vmatprep.subr.mxu0 0.0
    %788 = vmatpush2.xpose.msra.mxu0 0.0
    %789 = vmatprep.subr.mxu0 0.0
    %790 = vmatpush2.xpose.msra.mxu0 0.0
    %791 = vmatprep.subr.mxu0 0.0
    %792 = vmatpush2.xpose.msra.mxu0 0.0
    %793 = vmatprep.subr.mxu0 0.0
    %794 = vmatpush2.xpose.msra.mxu0 0.0
    %795 = vmatprep.subr.mxu0 0.0
    %796 = vmatpush2.xpose.msra.mxu0 0.0
    %797 = vmatprep.subr.mxu0 0.0
    %798 = vmatpush2.xpose.msra.mxu0 0.0
    %799 = vmatprep.subr.mxu0 0.0
    %800 = vmatpush2.xpose.msra.mxu0 0.0
    %801 = vmatprep.subr.mxu0 0.0
    %802 = vmatpush2.xpose.msra.mxu0 0.0
    %803 = vmatprep.subr.mxu0 0.0
    %804 = vmatpush2.xpose.msra.mxu0 0.0
    %805 = vmatprep.subr.mxu0 0.0
    %806 = vmatpush2.xpose.msra.mxu0 0.0
    %807 = vmatprep.subr.mxu0 0.0
    %808 = vmatpush2.xpose.msra.mxu0 0.0
    %809 = vmatprep.subr.mxu0 0.0
    %810 = vmatpush2.xpose.msra.mxu0 0.0
    %811 = vmatprep.subr.mxu0 0.0
    %812 = vmatpush2.xpose.msra.mxu0 0.0
    %813 = vmatprep.subr.mxu0 0.0
    %814 = vmatpush2.xpose.msra.mxu0 0.0
    %815 = vmatprep.subr.mxu0 0.0
    %816 = vmatpush2.xpose.msra.mxu0 0.0
    %817 = vmatprep.subr.mxu0 0.0
    %818 = vmatpush2.xpose.msra.mxu0 0.0
    %819 = vmatprep.mubr.f32.mxu0 0.0
    %v820 = vand.u32 %v123, 4294901760
    %821 = vmatmul.mubr.f32.gmra.mxu0 %v820
    %v822 = vpop.f32.mrf.mxu0
    %v823 = vadd.f32 %v730, %v822
    %v824 = vpop.f32.mrf.mxu0
    %825 = vmatprep.mubr.f32.mxu0 0.0
    %v826 = vand.u32 %v124, 4294901760
    %827 = vmatmul.mubr.f32.gmra.mxu0 %v826
    %v828 = vpop.f32.mrf.mxu0
    %v829 = vadd.f32 %v736, %v828
    %v830 = vpop.f32.mrf.mxu0
    %831 = vdwg.mxu0
    %v832 = vmax.f32 %v823, 0.0
    %v833 = vmax.f32 %v829, 0.0
    %v834 = vld [vmem:[#allocation3] sm:$0xff]
    %v835 = vld [vmem:[#allocation3 + $0x8] sm:$0xff]
    %v836 = vld [vmem:[#allocation9] sm:$0xff]
    %v837 = vld [vmem:[#allocation9 + $0x8] sm:$0xff]
    %v838 = vld [vmem:[#allocation9 + $0x10] sm:$0xff]
    %v839 = vld [vmem:[#allocation9 + $0x18] sm:$0xff]
    %v840 = vld [vmem:[#allocation9 + $0x20] sm:$0xff]
    %v841 = vld [vmem:[#allocation9 + $0x28] sm:$0xff]
    %v842 = vld [vmem:[#allocation9 + $0x30] sm:$0xff]
    %v843 = vld [vmem:[#allocation9 + $0x38] sm:$0xff]
    %v844 = vld [vmem:[#allocation9 + $0x40] sm:$0xff]
    %v845 = vld [vmem:[#allocation9 + $0x48] sm:$0xff]
    %v846 = vld [vmem:[#allocation9 + $0x50] sm:$0xff]
    %v847 = vld [vmem:[#allocation9 + $0x58] sm:$0xff]
    %v848 = vld [vmem:[#allocation9 + $0x60] sm:$0xff]
    %v849 = vld [vmem:[#allocation9 + $0x68] sm:$0xff]
    %v850 = vld [vmem:[#allocation9 + $0x70] sm:$0xff]
    %v851 = vld [vmem:[#allocation9 + $0x78] sm:$0xff]
    %852 = vmatprep.subr.mxu0 0.0
    %v853 = vand.u32 %v851, 4294901760
    %854 = vmatpush1.msra.mxu0 %v853
    %855 = vmatprep.subr.mxu0 0.0
    %v856 = vand.u32 %v850, 4294901760
    %857 = vmatpush1.msra.mxu0 %v856
    %858 = vmatprep.subr.mxu0 0.0
    %v859 = vand.u32 %v849, 4294901760
    %860 = vmatpush1.msra.mxu0 %v859
    %861 = vmatprep.subr.mxu0 0.0
    %v862 = vand.u32 %v848, 4294901760
    %863 = vmatpush1.msra.mxu0 %v862
    %864 = vmatprep.subr.mxu0 0.0
    %v865 = vand.u32 %v847, 4294901760
    %866 = vmatpush1.msra.mxu0 %v865
    %867 = vmatprep.subr.mxu0 0.0
    %v868 = vand.u32 %v846, 4294901760
    %869 = vmatpush1.msra.mxu0 %v868
    %870 = vmatprep.subr.mxu0 0.0
    %v871 = vand.u32 %v845, 4294901760
    %872 = vmatpush1.msra.mxu0 %v871
    %873 = vmatprep.subr.mxu0 0.0
    %v874 = vand.u32 %v844, 4294901760
    %875 = vmatpush1.msra.mxu0 %v874
    %876 = vmatprep.subr.mxu0 0.0
    %v877 = vand.u32 %v843, 4294901760
    %878 = vmatpush1.msra.mxu0 %v877
    %879 = vmatprep.subr.mxu0 0.0
    %v880 = vand.u32 %v842, 4294901760
    %881 = vmatpush1.msra.mxu0 %v880
    %882 = vmatprep.subr.mxu0 0.0
    %v883 = vand.u32 %v841, 4294901760
    %884 = vmatpush1.msra.mxu0 %v883
    %885 = vmatprep.subr.mxu0 0.0
    %v886 = vand.u32 %v840, 4294901760
    %887 = vmatpush1.msra.mxu0 %v886
    %888 = vmatprep.subr.mxu0 0.0
    %v889 = vand.u32 %v839, 4294901760
    %890 = vmatpush1.msra.mxu0 %v889
    %891 = vmatprep.subr.mxu0 0.0
    %v892 = vand.u32 %v838, 4294901760
    %893 = vmatpush1.msra.mxu0 %v892
    %894 = vmatprep.subr.mxu0 0.0
    %v895 = vand.u32 %v837, 4294901760
    %896 = vmatpush1.msra.mxu0 %v895
    %897 = vmatprep.subr.mxu0 0.0
    %v898 = vand.u32 %v836, 4294901760
    %899 = vmatpush1.msra.mxu0 %v898
    %900 = vmatprep.subr.mxu0 0.0
    %901 = vmatpush2.msra.mxu0 0.0
    %902 = vmatprep.subr.mxu0 0.0
    %903 = vmatpush2.msra.mxu0 0.0
    %904 = vmatprep.subr.mxu0 0.0
    %905 = vmatpush2.msra.mxu0 0.0
    %906 = vmatprep.subr.mxu0 0.0
    %907 = vmatpush2.msra.mxu0 0.0
    %908 = vmatprep.subr.mxu0 0.0
    %909 = vmatpush2.msra.mxu0 0.0
    %910 = vmatprep.subr.mxu0 0.0
    %911 = vmatpush2.msra.mxu0 0.0
    %912 = vmatprep.subr.mxu0 0.0
    %913 = vmatpush2.msra.mxu0 0.0
    %914 = vmatprep.subr.mxu0 0.0
    %915 = vmatpush2.msra.mxu0 0.0
    %916 = vmatprep.subr.mxu0 0.0
    %917 = vmatpush2.msra.mxu0 0.0
    %918 = vmatprep.subr.mxu0 0.0
    %919 = vmatpush2.msra.mxu0 0.0
    %920 = vmatprep.subr.mxu0 0.0
    %921 = vmatpush2.msra.mxu0 0.0
    %922 = vmatprep.subr.mxu0 0.0
    %923 = vmatpush2.msra.mxu0 0.0
    %924 = vmatprep.subr.mxu0 0.0
    %925 = vmatpush2.msra.mxu0 0.0
    %926 = vmatprep.subr.mxu0 0.0
    %927 = vmatpush2.msra.mxu0 0.0
    %928 = vmatprep.subr.mxu0 0.0
    %929 = vmatpush2.msra.mxu0 0.0
    %930 = vmatprep.subr.mxu0 0.0
    %931 = vmatpush2.msra.mxu0 0.0
    %932 = vmatprep.mubr.f32.mxu0 0.0
    %v933 = vand.u32 %v832, 4294901760
    %v934 = vsub.f32 %v832, %v933
    %v935 = vand.u32 %v934, 4294901760
    %v936 = vsub.f32 %v934, %v935
    %v937 = vand.u32 %v936, 4294901760
    %938 = vmatmul.mubr.f32.gmra.mxu0 %v937
    %v939 = vpop.f32.mrf.mxu0
    %v940 = vadd.f32 0.0, %v939
    %v941 = vpop.f32.mrf.mxu0
    %942 = vmatprep.mubr.f32.mxu0 0.0
    %v943 = vand.u32 %v833, 4294901760
    %v944 = vsub.f32 %v833, %v943
    %v945 = vand.u32 %v944, 4294901760
    %v946 = vsub.f32 %v944, %v945
    %v947 = vand.u32 %v946, 4294901760
    %948 = vmatmul.mubr.f32.gmra.mxu0 %v947
    %v949 = vpop.f32.mrf.mxu0
    %v950 = vadd.f32 0.0, %v949
    %v951 = vpop.f32.mrf.mxu0
    %952 = vdwg.mxu0
    %953 = vmatprep.subr.mxu0 0.0
    %v954 = vand.u32 %v851, 4294901760
    %v955 = vsub.f32 %v851, %v954
    %v956 = vand.u32 %v955, 4294901760
    %v957 = vsub.f32 %v955, %v956
    %v958 = vand.u32 %v957, 4294901760
    %959 = vmatpush1.msra.mxu0 %v958
    %960 = vmatprep.subr.mxu0 0.0
    %v961 = vand.u32 %v850, 4294901760
    %v962 = vsub.f32 %v850, %v961
    %v963 = vand.u32 %v962, 4294901760
    %v964 = vsub.f32 %v962, %v963
    %v965 = vand.u32 %v964, 4294901760
    %966 = vmatpush1.msra.mxu0 %v965
    %967 = vmatprep.subr.mxu0 0.0
    %v968 = vand.u32 %v849, 4294901760
    %v969 = vsub.f32 %v849, %v968
    %v970 = vand.u32 %v969, 4294901760
    %v971 = vsub.f32 %v969, %v970
    %v972 = vand.u32 %v971, 4294901760
    %973 = vmatpush1.msra.mxu0 %v972
    %974 = vmatprep.subr.mxu0 0.0
    %v975 = vand.u32 %v848, 4294901760
    %v976 = vsub.f32 %v848, %v975
    %v977 = vand.u32 %v976, 4294901760
    %v978 = vsub.f32 %v976, %v977
    %v979 = vand.u32 %v978, 4294901760
    %980 = vmatpush1.msra.mxu0 %v979
    %981 = vmatprep.subr.mxu0 0.0
    %v982 = vand.u32 %v847, 4294901760
    %v983 = vsub.f32 %v847, %v982
    %v984 = vand.u32 %v983, 4294901760
    %v985 = vsub.f32 %v983, %v984
    %v986 = vand.u32 %v985, 4294901760
    %987 = vmatpush1.msra.mxu0 %v986
    %988 = vmatprep.subr.mxu0 0.0
    %v989 = vand.u32 %v846, 4294901760
    %v990 = vsub.f32 %v846, %v989
    %v991 = vand.u32 %v990, 4294901760
    %v992 = vsub.f32 %v990, %v991
    %v993 = vand.u32 %v992, 4294901760
    %994 = vmatpush1.msra.mxu0 %v993
    %995 = vmatprep.subr.mxu0 0.0
    %v996 = vand.u32 %v845, 4294901760
    %v997 = vsub.f32 %v845, %v996
    %v998 = vand.u32 %v997, 4294901760
    %v999 = vsub.f32 %v997, %v998
    %v1000 = vand.u32 %v999, 4294901760
    %1001 = vmatpush1.msra.mxu0 %v1000
    %1002 = vmatprep.subr.mxu0 0.0
    %v1003 = vand.u32 %v844, 4294901760
    %v1004 = vsub.f32 %v844, %v1003
    %v1005 = vand.u32 %v1004, 4294901760
    %v1006 = vsub.f32 %v1004, %v1005
    %v1007 = vand.u32 %v1006, 4294901760
    %1008 = vmatpush1.msra.mxu0 %v1007
    %1009 = vmatprep.subr.mxu0 0.0
    %v1010 = vand.u32 %v843, 4294901760
    %v1011 = vsub.f32 %v843, %v1010
    %v1012 = vand.u32 %v1011, 4294901760
    %v1013 = vsub.f32 %v1011, %v1012
    %v1014 = vand.u32 %v1013, 4294901760
    %1015 = vmatpush1.msra.mxu0 %v1014
    %1016 = vmatprep.subr.mxu0 0.0
    %v1017 = vand.u32 %v842, 4294901760
    %v1018 = vsub.f32 %v842, %v1017
    %v1019 = vand.u32 %v1018, 4294901760
    %v1020 = vsub.f32 %v1018, %v1019
    %v1021 = vand.u32 %v1020, 4294901760
    %1022 = vmatpush1.msra.mxu0 %v1021
    %1023 = vmatprep.subr.mxu0 0.0
    %v1024 = vand.u32 %v841, 4294901760
    %v1025 = vsub.f32 %v841, %v1024
    %v1026 = vand.u32 %v1025, 4294901760
    %v1027 = vsub.f32 %v1025, %v1026
    %v1028 = vand.u32 %v1027, 4294901760
    %1029 = vmatpush1.msra.mxu0 %v1028
    %1030 = vmatprep.subr.mxu0 0.0
    %v1031 = vand.u32 %v840, 4294901760
    %v1032 = vsub.f32 %v840, %v1031
    %v1033 = vand.u32 %v1032, 4294901760
    %v1034 = vsub.f32 %v1032, %v1033
    %v1035 = vand.u32 %v1034, 4294901760
    %1036 = vmatpush1.msra.mxu0 %v1035
    %1037 = vmatprep.subr.mxu0 0.0
    %v1038 = vand.u32 %v839, 4294901760
    %v1039 = vsub.f32 %v839, %v1038
    %v1040 = vand.u32 %v1039, 4294901760
    %v1041 = vsub.f32 %v1039, %v1040
    %v1042 = vand.u32 %v1041, 4294901760
    %1043 = vmatpush1.msra.mxu0 %v1042
    %1044 = vmatprep.subr.mxu0 0.0
    %v1045 = vand.u32 %v838, 4294901760
    %v1046 = vsub.f32 %v838, %v1045
    %v1047 = vand.u32 %v1046, 4294901760
    %v1048 = vsub.f32 %v1046, %v1047
    %v1049 = vand.u32 %v1048, 4294901760
    %1050 = vmatpush1.msra.mxu0 %v1049
    %1051 = vmatprep.subr.mxu0 0.0
    %v1052 = vand.u32 %v837, 4294901760
    %v1053 = vsub.f32 %v837, %v1052
    %v1054 = vand.u32 %v1053, 4294901760
    %v1055 = vsub.f32 %v1053, %v1054
    %v1056 = vand.u32 %v1055, 4294901760
    %1057 = vmatpush1.msra.mxu0 %v1056
    %1058 = vmatprep.subr.mxu0 0.0
    %v1059 = vand.u32 %v836, 4294901760
    %v1060 = vsub.f32 %v836, %v1059
    %v1061 = vand.u32 %v1060, 4294901760
    %v1062 = vsub.f32 %v1060, %v1061
    %v1063 = vand.u32 %v1062, 4294901760
    %1064 = vmatpush1.msra.mxu0 %v1063
    %1065 = vmatprep.subr.mxu0 0.0
    %1066 = vmatpush2.msra.mxu0 0.0
    %1067 = vmatprep.subr.mxu0 0.0
    %1068 = vmatpush2.msra.mxu0 0.0
    %1069 = vmatprep.subr.mxu0 0.0
    %1070 = vmatpush2.msra.mxu0 0.0
    %1071 = vmatprep.subr.mxu0 0.0
    %1072 = vmatpush2.msra.mxu0 0.0
    %1073 = vmatprep.subr.mxu0 0.0
    %1074 = vmatpush2.msra.mxu0 0.0
    %1075 = vmatprep.subr.mxu0 0.0
    %1076 = vmatpush2.msra.mxu0 0.0
    %1077 = vmatprep.subr.mxu0 0.0
    %1078 = vmatpush2.msra.mxu0 0.0
    %1079 = vmatprep.subr.mxu0 0.0
    %1080 = vmatpush2.msra.mxu0 0.0
    %1081 = vmatprep.subr.mxu0 0.0
    %1082 = vmatpush2.msra.mxu0 0.0
    %1083 = vmatprep.subr.mxu0 0.0
    %1084 = vmatpush2.msra.mxu0 0.0
    %1085 = vmatprep.subr.mxu0 0.0
    %1086 = vmatpush2.msra.mxu0 0.0
    %1087 = vmatprep.subr.mxu0 0.0
    %1088 = vmatpush2.msra.mxu0 0.0
    %1089 = vmatprep.subr.mxu0 0.0
    %1090 = vmatpush2.msra.mxu0 0.0
    %1091 = vmatprep.subr.mxu0 0.0
    %1092 = vmatpush2.msra.mxu0 0.0
    %1093 = vmatprep.subr.mxu0 0.0
    %1094 = vmatpush2.msra.mxu0 0.0
    %1095 = vmatprep.subr.mxu0 0.0
    %1096 = vmatpush2.msra.mxu0 0.0
    %1097 = vmatprep.mubr.f32.mxu0 0.0
    %v1098 = vand.u32 %v832, 4294901760
    %1099 = vmatmul.mubr.f32.gmra.mxu0 %v1098
    %v1100 = vpop.f32.mrf.mxu0
    %v1101 = vadd.f32 %v940, %v1100
    %v1102 = vpop.f32.mrf.mxu0
    %1103 = vmatprep.mubr.f32.mxu0 0.0
    %v1104 = vand.u32 %v833, 4294901760
    %1105 = vmatmul.mubr.f32.gmra.mxu0 %v1104
    %v1106 = vpop.f32.mrf.mxu0
    %v1107 = vadd.f32 %v950, %v1106
    %v1108 = vpop.f32.mrf.mxu0
    %1109 = vdwg.mxu0
    %1110 = vmatprep.subr.mxu0 0.0
    %v1111 = vand.u32 %v851, 4294901760
    %v1112 = vsub.f32 %v851, %v1111
    %1113 = vmatpush1.msra.mxu0 %v1112
    %1114 = vmatprep.subr.mxu0 0.0
    %v1115 = vand.u32 %v850, 4294901760
    %v1116 = vsub.f32 %v850, %v1115
    %1117 = vmatpush1.msra.mxu0 %v1116
    %1118 = vmatprep.subr.mxu0 0.0
    %v1119 = vand.u32 %v849, 4294901760
    %v1120 = vsub.f32 %v849, %v1119
    %1121 = vmatpush1.msra.mxu0 %v1120
    %1122 = vmatprep.subr.mxu0 0.0
    %v1123 = vand.u32 %v848, 4294901760
    %v1124 = vsub.f32 %v848, %v1123
    %1125 = vmatpush1.msra.mxu0 %v1124
    %1126 = vmatprep.subr.mxu0 0.0
    %v1127 = vand.u32 %v847, 4294901760
    %v1128 = vsub.f32 %v847, %v1127
    %1129 = vmatpush1.msra.mxu0 %v1128
    %1130 = vmatprep.subr.mxu0 0.0
    %v1131 = vand.u32 %v846, 4294901760
    %v1132 = vsub.f32 %v846, %v1131
    %1133 = vmatpush1.msra.mxu0 %v1132
    %1134 = vmatprep.subr.mxu0 0.0
    %v1135 = vand.u32 %v845, 4294901760
    %v1136 = vsub.f32 %v845, %v1135
    %1137 = vmatpush1.msra.mxu0 %v1136
    %1138 = vmatprep.subr.mxu0 0.0
    %v1139 = vand.u32 %v844, 4294901760
    %v1140 = vsub.f32 %v844, %v1139
    %1141 = vmatpush1.msra.mxu0 %v1140
    %1142 = vmatprep.subr.mxu0 0.0
    %v1143 = vand.u32 %v843, 4294901760
    %v1144 = vsub.f32 %v843, %v1143
    %1145 = vmatpush1.msra.mxu0 %v1144
    %1146 = vmatprep.subr.mxu0 0.0
    %v1147 = vand.u32 %v842, 4294901760
    %v1148 = vsub.f32 %v842, %v1147
    %1149 = vmatpush1.msra.mxu0 %v1148
    %1150 = vmatprep.subr.mxu0 0.0
    %v1151 = vand.u32 %v841, 4294901760
    %v1152 = vsub.f32 %v841, %v1151
    %1153 = vmatpush1.msra.mxu0 %v1152
    %1154 = vmatprep.subr.mxu0 0.0
    %v1155 = vand.u32 %v840, 4294901760
    %v1156 = vsub.f32 %v840, %v1155
    %1157 = vmatpush1.msra.mxu0 %v1156
    %1158 = vmatprep.subr.mxu0 0.0
    %v1159 = vand.u32 %v839, 4294901760
    %v1160 = vsub.f32 %v839, %v1159
    %1161 = vmatpush1.msra.mxu0 %v1160
    %1162 = vmatprep.subr.mxu0 0.0
    %v1163 = vand.u32 %v838, 4294901760
    %v1164 = vsub.f32 %v838, %v1163
    %1165 = vmatpush1.msra.mxu0 %v1164
    %1166 = vmatprep.subr.mxu0 0.0
    %v1167 = vand.u32 %v837, 4294901760
    %v1168 = vsub.f32 %v837, %v1167
    %1169 = vmatpush1.msra.mxu0 %v1168
    %1170 = vmatprep.subr.mxu0 0.0
    %v1171 = vand.u32 %v836, 4294901760
    %v1172 = vsub.f32 %v836, %v1171
    %1173 = vmatpush1.msra.mxu0 %v1172
    %1174 = vmatprep.subr.mxu0 0.0
    %1175 = vmatpush2.msra.mxu0 0.0
    %1176 = vmatprep.subr.mxu0 0.0
    %1177 = vmatpush2.msra.mxu0 0.0
    %1178 = vmatprep.subr.mxu0 0.0
    %1179 = vmatpush2.msra.mxu0 0.0
    %1180 = vmatprep.subr.mxu0 0.0
    %1181 = vmatpush2.msra.mxu0 0.0
    %1182 = vmatprep.subr.mxu0 0.0
    %1183 = vmatpush2.msra.mxu0 0.0
    %1184 = vmatprep.subr.mxu0 0.0
    %1185 = vmatpush2.msra.mxu0 0.0
    %1186 = vmatprep.subr.mxu0 0.0
    %1187 = vmatpush2.msra.mxu0 0.0
    %1188 = vmatprep.subr.mxu0 0.0
    %1189 = vmatpush2.msra.mxu0 0.0
    %1190 = vmatprep.subr.mxu0 0.0
    %1191 = vmatpush2.msra.mxu0 0.0
    %1192 = vmatprep.subr.mxu0 0.0
    %1193 = vmatpush2.msra.mxu0 0.0
    %1194 = vmatprep.subr.mxu0 0.0
    %1195 = vmatpush2.msra.mxu0 0.0
    %1196 = vmatprep.subr.mxu0 0.0
    %1197 = vmatpush2.msra.mxu0 0.0
    %1198 = vmatprep.subr.mxu0 0.0
    %1199 = vmatpush2.msra.mxu0 0.0
    %1200 = vmatprep.subr.mxu0 0.0
    %1201 = vmatpush2.msra.mxu0 0.0
    %1202 = vmatprep.subr.mxu0 0.0
    %1203 = vmatpush2.msra.mxu0 0.0
    %1204 = vmatprep.subr.mxu0 0.0
    %1205 = vmatpush2.msra.mxu0 0.0
    %1206 = vmatprep.mubr.f32.mxu0 0.0
    %v1207 = vand.u32 %v832, 4294901760
    %v1208 = vsub.f32 %v832, %v1207
    %1209 = vmatmul.mubr.f32.gmra.mxu0 %v1208
    %v1210 = vpop.f32.mrf.mxu0
    %v1211 = vadd.f32 %v1101, %v1210
    %v1212 = vpop.f32.mrf.mxu0
    %1213 = vmatprep.mubr.f32.mxu0 0.0
    %v1214 = vand.u32 %v833, 4294901760
    %v1215 = vsub.f32 %v833, %v1214
    %1216 = vmatmul.mubr.f32.gmra.mxu0 %v1215
    %v1217 = vpop.f32.mrf.mxu0
    %v1218 = vadd.f32 %v1107, %v1217
    %v1219 = vpop.f32.mrf.mxu0
    %1220 = vdwg.mxu0
    %1221 = vmatprep.subr.mxu0 0.0
    %v1222 = vand.u32 %v851, 4294901760
    %1223 = vmatpush1.msra.mxu0 %v1222
    %1224 = vmatprep.subr.mxu0 0.0
    %v1225 = vand.u32 %v850, 4294901760
    %1226 = vmatpush1.msra.mxu0 %v1225
    %1227 = vmatprep.subr.mxu0 0.0
    %v1228 = vand.u32 %v849, 4294901760
    %1229 = vmatpush1.msra.mxu0 %v1228
    %1230 = vmatprep.subr.mxu0 0.0
    %v1231 = vand.u32 %v848, 4294901760
    %1232 = vmatpush1.msra.mxu0 %v1231
    %1233 = vmatprep.subr.mxu0 0.0
    %v1234 = vand.u32 %v847, 4294901760
    %1235 = vmatpush1.msra.mxu0 %v1234
    %1236 = vmatprep.subr.mxu0 0.0
    %v1237 = vand.u32 %v846, 4294901760
    %1238 = vmatpush1.msra.mxu0 %v1237
    %1239 = vmatprep.subr.mxu0 0.0
    %v1240 = vand.u32 %v845, 4294901760
    %1241 = vmatpush1.msra.mxu0 %v1240
    %1242 = vmatprep.subr.mxu0 0.0
    %v1243 = vand.u32 %v844, 4294901760
    %1244 = vmatpush1.msra.mxu0 %v1243
    %1245 = vmatprep.subr.mxu0 0.0
    %v1246 = vand.u32 %v843, 4294901760
    %1247 = vmatpush1.msra.mxu0 %v1246
    %1248 = vmatprep.subr.mxu0 0.0
    %v1249 = vand.u32 %v842, 4294901760
    %1250 = vmatpush1.msra.mxu0 %v1249
    %1251 = vmatprep.subr.mxu0 0.0
    %v1252 = vand.u32 %v841, 4294901760
    %1253 = vmatpush1.msra.mxu0 %v1252
    %1254 = vmatprep.subr.mxu0 0.0
    %v1255 = vand.u32 %v840, 4294901760
    %1256 = vmatpush1.msra.mxu0 %v1255
    %1257 = vmatprep.subr.mxu0 0.0
    %v1258 = vand.u32 %v839, 4294901760
    %1259 = vmatpush1.msra.mxu0 %v1258
    %1260 = vmatprep.subr.mxu0 0.0
    %v1261 = vand.u32 %v838, 4294901760
    %1262 = vmatpush1.msra.mxu0 %v1261
    %1263 = vmatprep.subr.mxu0 0.0
    %v1264 = vand.u32 %v837, 4294901760
    %1265 = vmatpush1.msra.mxu0 %v1264
    %1266 = vmatprep.subr.mxu0 0.0
    %v1267 = vand.u32 %v836, 4294901760
    %1268 = vmatpush1.msra.mxu0 %v1267
    %1269 = vmatprep.subr.mxu0 0.0
    %1270 = vmatpush2.msra.mxu0 0.0
    %1271 = vmatprep.subr.mxu0 0.0
    %1272 = vmatpush2.msra.mxu0 0.0
    %1273 = vmatprep.subr.mxu0 0.0
    %1274 = vmatpush2.msra.mxu0 0.0
    %1275 = vmatprep.subr.mxu0 0.0
    %1276 = vmatpush2.msra.mxu0 0.0
    %1277 = vmatprep.subr.mxu0 0.0
    %1278 = vmatpush2.msra.mxu0 0.0
    %1279 = vmatprep.subr.mxu0 0.0
    %1280 = vmatpush2.msra.mxu0 0.0
    %1281 = vmatprep.subr.mxu0 0.0
    %1282 = vmatpush2.msra.mxu0 0.0
    %1283 = vmatprep.subr.mxu0 0.0
    %1284 = vmatpush2.msra.mxu0 0.0
    %1285 = vmatprep.subr.mxu0 0.0
    %1286 = vmatpush2.msra.mxu0 0.0
    %1287 = vmatprep.subr.mxu0 0.0
    %1288 = vmatpush2.msra.mxu0 0.0
    %1289 = vmatprep.subr.mxu0 0.0
    %1290 = vmatpush2.msra.mxu0 0.0
    %1291 = vmatprep.subr.mxu0 0.0
    %1292 = vmatpush2.msra.mxu0 0.0
    %1293 = vmatprep.subr.mxu0 0.0
    %1294 = vmatpush2.msra.mxu0 0.0
    %1295 = vmatprep.subr.mxu0 0.0
    %1296 = vmatpush2.msra.mxu0 0.0
    %1297 = vmatprep.subr.mxu0 0.0
    %1298 = vmatpush2.msra.mxu0 0.0
    %1299 = vmatprep.subr.mxu0 0.0
    %1300 = vmatpush2.msra.mxu0 0.0
    %1301 = vmatprep.mubr.f32.mxu0 0.0
    %v1302 = vand.u32 %v832, 4294901760
    %v1303 = vsub.f32 %v832, %v1302
    %v1304 = vand.u32 %v1303, 4294901760
    %1305 = vmatmul.mubr.f32.gmra.mxu0 %v1304
    %v1306 = vpop.f32.mrf.mxu0
    %v1307 = vadd.f32 %v1211, %v1306
    %v1308 = vpop.f32.mrf.mxu0
    %1309 = vmatprep.mubr.f32.mxu0 0.0
    %v1310 = vand.u32 %v833, 4294901760
    %v1311 = vsub.f32 %v833, %v1310
    %v1312 = vand.u32 %v1311, 4294901760
    %1313 = vmatmul.mubr.f32.gmra.mxu0 %v1312
    %v1314 = vpop.f32.mrf.mxu0
    %v1315 = vadd.f32 %v1218, %v1314
    %v1316 = vpop.f32.mrf.mxu0
    %1317 = vdwg.mxu0
    %1318 = vmatprep.subr.mxu0 0.0
    %v1319 = vand.u32 %v851, 4294901760
    %v1320 = vsub.f32 %v851, %v1319
    %v1321 = vand.u32 %v1320, 4294901760
    %1322 = vmatpush1.msra.mxu0 %v1321
    %1323 = vmatprep.subr.mxu0 0.0
    %v1324 = vand.u32 %v850, 4294901760
    %v1325 = vsub.f32 %v850, %v1324
    %v1326 = vand.u32 %v1325, 4294901760
    %1327 = vmatpush1.msra.mxu0 %v1326
    %1328 = vmatprep.subr.mxu0 0.0
    %v1329 = vand.u32 %v849, 4294901760
    %v1330 = vsub.f32 %v849, %v1329
    %v1331 = vand.u32 %v1330, 4294901760
    %1332 = vmatpush1.msra.mxu0 %v1331
    %1333 = vmatprep.subr.mxu0 0.0
    %v1334 = vand.u32 %v848, 4294901760
    %v1335 = vsub.f32 %v848, %v1334
    %v1336 = vand.u32 %v1335, 4294901760
    %1337 = vmatpush1.msra.mxu0 %v1336
    %1338 = vmatprep.subr.mxu0 0.0
    %v1339 = vand.u32 %v847, 4294901760
    %v1340 = vsub.f32 %v847, %v1339
    %v1341 = vand.u32 %v1340, 4294901760
    %1342 = vmatpush1.msra.mxu0 %v1341
    %1343 = vmatprep.subr.mxu0 0.0
    %v1344 = vand.u32 %v846, 4294901760
    %v1345 = vsub.f32 %v846, %v1344
    %v1346 = vand.u32 %v1345, 4294901760
    %1347 = vmatpush1.msra.mxu0 %v1346
    %1348 = vmatprep.subr.mxu0 0.0
    %v1349 = vand.u32 %v845, 4294901760
    %v1350 = vsub.f32 %v845, %v1349
    %v1351 = vand.u32 %v1350, 4294901760
    %1352 = vmatpush1.msra.mxu0 %v1351
    %1353 = vmatprep.subr.mxu0 0.0
    %v1354 = vand.u32 %v844, 4294901760
    %v1355 = vsub.f32 %v844, %v1354
    %v1356 = vand.u32 %v1355, 4294901760
    %1357 = vmatpush1.msra.mxu0 %v1356
    %1358 = vmatprep.subr.mxu0 0.0
    %v1359 = vand.u32 %v843, 4294901760
    %v1360 = vsub.f32 %v843, %v1359
    %v1361 = vand.u32 %v1360, 4294901760
    %1362 = vmatpush1.msra.mxu0 %v1361
    %1363 = vmatprep.subr.mxu0 0.0
    %v1364 = vand.u32 %v842, 4294901760
    %v1365 = vsub.f32 %v842, %v1364
    %v1366 = vand.u32 %v1365, 4294901760
    %1367 = vmatpush1.msra.mxu0 %v1366
    %1368 = vmatprep.subr.mxu0 0.0
    %v1369 = vand.u32 %v841, 4294901760
    %v1370 = vsub.f32 %v841, %v1369
    %v1371 = vand.u32 %v1370, 4294901760
    %1372 = vmatpush1.msra.mxu0 %v1371
    %1373 = vmatprep.subr.mxu0 0.0
    %v1374 = vand.u32 %v840, 4294901760
    %v1375 = vsub.f32 %v840, %v1374
    %v1376 = vand.u32 %v1375, 4294901760
    %1377 = vmatpush1.msra.mxu0 %v1376
    %1378 = vmatprep.subr.mxu0 0.0
    %v1379 = vand.u32 %v839, 4294901760
    %v1380 = vsub.f32 %v839, %v1379
    %v1381 = vand.u32 %v1380, 4294901760
    %1382 = vmatpush1.msra.mxu0 %v1381
    %1383 = vmatprep.subr.mxu0 0.0
    %v1384 = vand.u32 %v838, 4294901760
    %v1385 = vsub.f32 %v838, %v1384
    %v1386 = vand.u32 %v1385, 4294901760
    %1387 = vmatpush1.msra.mxu0 %v1386
    %1388 = vmatprep.subr.mxu0 0.0
    %v1389 = vand.u32 %v837, 4294901760
    %v1390 = vsub.f32 %v837, %v1389
    %v1391 = vand.u32 %v1390, 4294901760
    %1392 = vmatpush1.msra.mxu0 %v1391
    %1393 = vmatprep.subr.mxu0 0.0
    %v1394 = vand.u32 %v836, 4294901760
    %v1395 = vsub.f32 %v836, %v1394
    %v1396 = vand.u32 %v1395, 4294901760
    %1397 = vmatpush1.msra.mxu0 %v1396
    %1398 = vmatprep.subr.mxu0 0.0
    %1399 = vmatpush2.msra.mxu0 0.0
    %1400 = vmatprep.subr.mxu0 0.0
    %1401 = vmatpush2.msra.mxu0 0.0
    %1402 = vmatprep.subr.mxu0 0.0
    %1403 = vmatpush2.msra.mxu0 0.0
    %1404 = vmatprep.subr.mxu0 0.0
    %1405 = vmatpush2.msra.mxu0 0.0
    %1406 = vmatprep.subr.mxu0 0.0
    %1407 = vmatpush2.msra.mxu0 0.0
    %1408 = vmatprep.subr.mxu0 0.0
    %1409 = vmatpush2.msra.mxu0 0.0
    %1410 = vmatprep.subr.mxu0 0.0
    %1411 = vmatpush2.msra.mxu0 0.0
    %1412 = vmatprep.subr.mxu0 0.0
    %1413 = vmatpush2.msra.mxu0 0.0
    %1414 = vmatprep.subr.mxu0 0.0
    %1415 = vmatpush2.msra.mxu0 0.0
    %1416 = vmatprep.subr.mxu0 0.0
    %1417 = vmatpush2.msra.mxu0 0.0
    %1418 = vmatprep.subr.mxu0 0.0
    %1419 = vmatpush2.msra.mxu0 0.0
    %1420 = vmatprep.subr.mxu0 0.0
    %1421 = vmatpush2.msra.mxu0 0.0
    %1422 = vmatprep.subr.mxu0 0.0
    %1423 = vmatpush2.msra.mxu0 0.0
    %1424 = vmatprep.subr.mxu0 0.0
    %1425 = vmatpush2.msra.mxu0 0.0
    %1426 = vmatprep.subr.mxu0 0.0
    %1427 = vmatpush2.msra.mxu0 0.0
    %1428 = vmatprep.subr.mxu0 0.0
    %1429 = vmatpush2.msra.mxu0 0.0
    %1430 = vmatprep.mubr.f32.mxu0 0.0
    %v1431 = vand.u32 %v832, 4294901760
    %1432 = vmatmul.mubr.f32.gmra.mxu0 %v1431
    %v1433 = vpop.f32.mrf.mxu0
    %v1434 = vadd.f32 %v1307, %v1433
    %v1435 = vpop.f32.mrf.mxu0
    %1436 = vmatprep.mubr.f32.mxu0 0.0
    %v1437 = vand.u32 %v833, 4294901760
    %1438 = vmatmul.mubr.f32.gmra.mxu0 %v1437
    %v1439 = vpop.f32.mrf.mxu0
    %v1440 = vadd.f32 %v1315, %v1439
    %v1441 = vpop.f32.mrf.mxu0
    %1442 = vdwg.mxu0
    %1443 = vmatprep.subr.mxu0 0.0
    %v1444 = vand.u32 %v851, 4294901760
    %1445 = vmatpush1.msra.mxu0 %v1444
    %1446 = vmatprep.subr.mxu0 0.0
    %v1447 = vand.u32 %v850, 4294901760
    %1448 = vmatpush1.msra.mxu0 %v1447
    %1449 = vmatprep.subr.mxu0 0.0
    %v1450 = vand.u32 %v849, 4294901760
    %1451 = vmatpush1.msra.mxu0 %v1450
    %1452 = vmatprep.subr.mxu0 0.0
    %v1453 = vand.u32 %v848, 4294901760
    %1454 = vmatpush1.msra.mxu0 %v1453
    %1455 = vmatprep.subr.mxu0 0.0
    %v1456 = vand.u32 %v847, 4294901760
    %1457 = vmatpush1.msra.mxu0 %v1456
    %1458 = vmatprep.subr.mxu0 0.0
    %v1459 = vand.u32 %v846, 4294901760
    %1460 = vmatpush1.msra.mxu0 %v1459
    %1461 = vmatprep.subr.mxu0 0.0
    %v1462 = vand.u32 %v845, 4294901760
    %1463 = vmatpush1.msra.mxu0 %v1462
    %1464 = vmatprep.subr.mxu0 0.0
    %v1465 = vand.u32 %v844, 4294901760
    %1466 = vmatpush1.msra.mxu0 %v1465
    %1467 = vmatprep.subr.mxu0 0.0
    %v1468 = vand.u32 %v843, 4294901760
    %1469 = vmatpush1.msra.mxu0 %v1468
    %1470 = vmatprep.subr.mxu0 0.0
    %v1471 = vand.u32 %v842, 4294901760
    %1472 = vmatpush1.msra.mxu0 %v1471
    %1473 = vmatprep.subr.mxu0 0.0
    %v1474 = vand.u32 %v841, 4294901760
    %1475 = vmatpush1.msra.mxu0 %v1474
    %1476 = vmatprep.subr.mxu0 0.0
    %v1477 = vand.u32 %v840, 4294901760
    %1478 = vmatpush1.msra.mxu0 %v1477
    %1479 = vmatprep.subr.mxu0 0.0
    %v1480 = vand.u32 %v839, 4294901760
    %1481 = vmatpush1.msra.mxu0 %v1480
    %1482 = vmatprep.subr.mxu0 0.0
    %v1483 = vand.u32 %v838, 4294901760
    %1484 = vmatpush1.msra.mxu0 %v1483
    %1485 = vmatprep.subr.mxu0 0.0
    %v1486 = vand.u32 %v837, 4294901760
    %1487 = vmatpush1.msra.mxu0 %v1486
    %1488 = vmatprep.subr.mxu0 0.0
    %v1489 = vand.u32 %v836, 4294901760
    %1490 = vmatpush1.msra.mxu0 %v1489
    %1491 = vmatprep.subr.mxu0 0.0
    %1492 = vmatpush2.msra.mxu0 0.0
    %1493 = vmatprep.subr.mxu0 0.0
    %1494 = vmatpush2.msra.mxu0 0.0
    %1495 = vmatprep.subr.mxu0 0.0
    %1496 = vmatpush2.msra.mxu0 0.0
    %1497 = vmatprep.subr.mxu0 0.0
    %1498 = vmatpush2.msra.mxu0 0.0
    %1499 = vmatprep.subr.mxu0 0.0
    %1500 = vmatpush2.msra.mxu0 0.0
    %1501 = vmatprep.subr.mxu0 0.0
    %1502 = vmatpush2.msra.mxu0 0.0
    %1503 = vmatprep.subr.mxu0 0.0
    %1504 = vmatpush2.msra.mxu0 0.0
    %1505 = vmatprep.subr.mxu0 0.0
    %1506 = vmatpush2.msra.mxu0 0.0
    %1507 = vmatprep.subr.mxu0 0.0
    %1508 = vmatpush2.msra.mxu0 0.0
    %1509 = vmatprep.subr.mxu0 0.0
    %1510 = vmatpush2.msra.mxu0 0.0
    %1511 = vmatprep.subr.mxu0 0.0
    %1512 = vmatpush2.msra.mxu0 0.0
    %1513 = vmatprep.subr.mxu0 0.0
    %1514 = vmatpush2.msra.mxu0 0.0
    %1515 = vmatprep.subr.mxu0 0.0
    %1516 = vmatpush2.msra.mxu0 0.0
    %1517 = vmatprep.subr.mxu0 0.0
    %1518 = vmatpush2.msra.mxu0 0.0
    %1519 = vmatprep.subr.mxu0 0.0
    %1520 = vmatpush2.msra.mxu0 0.0
    %1521 = vmatprep.subr.mxu0 0.0
    %1522 = vmatpush2.msra.mxu0 0.0
    %1523 = vmatprep.mubr.f32.mxu0 0.0
    %v1524 = vand.u32 %v832, 4294901760
    %1525 = vmatmul.mubr.f32.gmra.mxu0 %v1524
    %v1526 = vpop.f32.mrf.mxu0
    %v1527 = vadd.f32 %v1434, %v1526
    %v1528 = vpop.f32.mrf.mxu0
    %1529 = vmatprep.mubr.f32.mxu0 0.0
    %v1530 = vand.u32 %v833, 4294901760
    %1531 = vmatmul.mubr.f32.gmra.mxu0 %v1530
    %v1532 = vpop.f32.mrf.mxu0
    %v1533 = vadd.f32 %v1440, %v1532
    %v1534 = vpop.f32.mrf.mxu0
    %1535 = vdwg.mxu0
    %v1536 = vadd.f32 %v834, %v1527
    %v1537 = vadd.f32 %v835, %v1533
    %1538 = vst [vmem:[#allocation3] sm:$0xff] %v1536
    %1539 = vst [vmem:[#allocation3 + $0x8] sm:$0xff] %v1537
    // Predicated region
    $region46: #{tpu_custom_call.1} parent=1 // pred_check
      %p1540 = pneg %p68
    $region47: #{tpu_custom_call.1} parent=1 // pred_check_branch
      %1542 = sbr.rel (%p1540) target = $region49
    $region48: #{tpu_custom_call.1} parent=1 // pred_region
      %v1543 = vld [vmem:[#allocation3] sm:$0xff]
      %v1544 = vld [vmem:[#allocation3 + $0x8] sm:$0xff]
      %v1545 = vld [vmem:[%s6] sm:$0x1]
      %v1547 = vlaneseq
      %v1548 = vshrl.u32 %v1547, 7
      %v1549 = vsub.s32 0, %v1548
      %v1550 = vrot.slane %v1545, %v1549
      %v1552 = vadd.f32 %v1543, %v1550
      %v1553 = vadd.f32 %v1544, %v1550
      %v1554 = vld [vmem:[#allocation4] sm:$0xff]
      %v1555 = vld [vmem:[#allocation4 + $0x8] sm:$0xff]
      %v1556 = vadd.f32 %v1552, %v1554
      %v1557 = vadd.f32 %v1553, %v1555
      %1558 = vst [vmem:[#allocation10] sm:$0xff] %v1556
      %1559 = vst [vmem:[#allocation10 + $0x8] sm:$0xff] %v1557
    $region49: #{tpu_custom_call.1} parent=1 // pred_fallthru
      _
    // Predicated region
    $region50: #{tpu_custom_call.1} parent=1 // pred_check
      _
    $region51: #{tpu_custom_call.1} parent=1 // pred_check_branch
      %1561 = sbr.rel (0) target = $region53
    $region52: #{tpu_custom_call.1} parent=1 // pred_region
      %s1563 = ssub.s32 256, 256
      %1564 = vsyncadd [#allocation6], %s1563
      %s1565 = sshll.u32 [#allocation10], 4
      %s1566 = int_to_ptr.vmem [resolvable:$true] %s1565
      %1571 = dma.vmem_to_hbm [thread:$0]  %s1566, 256, %s7, [#allocation6], 128, 128, 8
    $region53: #{tpu_custom_call.1} parent=1 // pred_fallthru
      _
    // Predicated region
    $region54: #{tpu_custom_call.1} parent=1 // pred_check
      _
    $region55: #{tpu_custom_call.1} parent=1 // pred_check_branch
      %1573 = sbr.rel (0) target = $region57
    $region56: #{tpu_custom_call.1} parent=1 // pred_region
      %1574 = dma.done [#allocation6], 256
    $region57: #{tpu_custom_call.1} parent=1 // pred_fallthru
      _
    %1575 = vsyncpa [#allocation5], 1
    %1576 = vsyncpa [#allocation8], 1
    %1577 = vsyncpa [#allocation6], 1

</llo_original>
